<compile_context>
chip_gen: v7x
topology: tpu7x:2x2x1
jax: 0.10.0
libtpu: 0.0.40
codegen_flags: <defaults>
</compile_context>

<pallas_src>
import math

import jax
import jax.numpy as jnp
from jax.experimental import pallas as pl
from jax.experimental.pallas import tpu as pltpu

IN_FEATURES = 512
OUT_FEATURES = 2048
TN = 512  # output-feature tile -> grid=(4,), see header


def prepare_weight(weight):
    """One-time (weight-load-time) transpose of the PyTorch (2048, 512) weight
    to the MXU-native (K, N) = (512, 2048) layout.  Not on the per-call path."""
    assert weight.shape == (OUT_FEATURES, IN_FEATURES)
    return jnp.asarray(weight).T


def _linear_gelu_kernel(x_ref, wt_ref, b_ref, o_ref):
    # x_ref: (M, K)   wt_ref: (K, TN)   b_ref: (1, TN)   o_ref: (M, TN)
    # Plain (M,K)@(K,TN) contraction -> f32 accumulation on the MXU.
    y = jnp.dot(x_ref[...], wt_ref[...], preferred_element_type=jnp.float32)
    y = y + b_ref[...]  # broadcast (1, TN) over rows

    # Exact GELU (approximate='none'), constants folded:
    #   gelu(y) = y * (0.5 + 0.5 * erf(y / sqrt(2)))
    inv_sqrt2 = jnp.float32(1.0 / math.sqrt(2.0))
    g = y * (0.5 + 0.5 * jax.lax.erf(y * inv_sqrt2))

    # Dropout(p=0.0) == identity
    o_ref[...] = g.astype(o_ref.dtype)


def linear_gelu_dropout(x, weight_t, bias):
    """x: (B, H, W, 512) f32; weight_t: (512, 2048) (pre-transposed, see
    prepare_weight); bias: (2048,)."""
    B, H, W, K = x.shape
    assert K == IN_FEATURES
    assert weight_t.shape == (IN_FEATURES, OUT_FEATURES)
    M = B * H * W

    assert OUT_FEATURES % TN == 0
    grid = (OUT_FEATURES // TN,)

    x2d = x.reshape(M, K)
    b2d = bias.reshape(1, OUT_FEATURES)

    out2d = pl.pallas_call(
        _linear_gelu_kernel,
        out_shape=jax.ShapeDtypeStruct((M, OUT_FEATURES), x.dtype),
        grid_spec=pltpu.PrefetchScalarGridSpec(
            num_scalar_prefetch=0,
            grid=grid,
            in_specs=[
                pl.BlockSpec((M, K), lambda j: (0, 0)),    # x: full (196, 512), resident across steps
                pl.BlockSpec((K, TN), lambda j: (0, j)),   # weight: (512, TN) column tile, MXU-native
                pl.BlockSpec((1, TN), lambda j: (0, j)),   # bias: (1, TN) tile
            ],
            out_specs=pl.BlockSpec((M, TN), lambda j: (0, j)),
        ),
        compiler_params=pltpu.CompilerParams(
            dimension_semantics=("parallel",),
        ),
    )(x2d, weight_t, b2d)

    return out2d.reshape(B, H, W, OUT_FEATURES)


def reference(x, weight, bias):
    y = jnp.einsum("bhwk,nk->bhwn", x, weight) + bias
    return 0.5 * y * (1.0 + jax.lax.erf(y / jnp.sqrt(2.0).astype(y.dtype)))


if __name__ == "__main__":
    key = jax.random.PRNGKey(0)
    kx, kw, kb = jax.random.split(key, 3)

    # Input matches the module's forward: [1, 14, 14, 512]
    x = jax.random.normal(kx, (1, 14, 14, IN_FEATURES), dtype=jnp.float32)

    # Deterministic parameter init (same bounds as nn.Linear default init),
    # weight in native PyTorch (out, in) layout.
    bound = 1.0 / math.sqrt(IN_FEATURES)
    weight = jax.random.uniform(
        kw, (OUT_FEATURES, IN_FEATURES), dtype=jnp.float32, minval=-bound, maxval=bound
    )
    bias = jax.random.uniform(
        kb, (OUT_FEATURES,), dtype=jnp.float32, minval=-bound, maxval=bound
    )

    # One-time weight preparation (amortized across forward calls).
    weight_t = jax.block_until_ready(prepare_weight(weight))

    out = jax.block_until_ready(linear_gelu_dropout(x, weight_t, bias))

    ref = jax.block_until_ready(reference(x, weight, bias))
    assert out.shape == (1, 14, 14, OUT_FEATURES)
    assert jnp.allclose(out, ref, atol=1e-4, rtol=1e-4)

    print("KERNEL_OK")
</pallas_src>

<mosaic_0001>
module attributes {stable_mosaic.version = 11 : i64} {
  func.func @_linear_gelu_kernel(%arg0: i32, %arg1: memref<196x512xf32, #tpu.memory_space<vmem>>, %arg2: memref<512x512xf32, #tpu.memory_space<vmem>>, %arg3: memref<1x512xf32, #tpu.memory_space<vmem>>, %arg4: memref<196x512xf32, #tpu.memory_space<vmem>>) attributes {dimension_semantics = [#tpu.dimension_semantics<parallel>], iteration_bounds = array<i64: 4>, scalar_prefetch = 0 : i64, scratch_operands = 0 : i64, tpu.core_type = #tpu.core_type<tc>, window_params = [{pipeline_mode = #tpu.pipeline_mode<synchronous>, transform_indices = @transform_0, window_bounds = array<i64: 196, 512>}, {transform_indices = @transform_1, window_bounds = array<i64: 512, 512>}, {transform_indices = @transform_2, window_bounds = array<i64: 1, 512>}, {transform_indices = @transform_3, window_bounds = array<i64: 196, 512>}]} {
    %c0 = arith.constant 0 : index
    %c0_0 = arith.constant 0 : index
    %0 = vector.load %arg1[%c0, %c0_0] : memref<196x512xf32, #tpu.memory_space<vmem>>, vector<196x512xf32>
    %c0_1 = arith.constant 0 : index
    %c0_2 = arith.constant 0 : index
    %1 = vector.load %arg2[%c0_1, %c0_2] : memref<512x512xf32, #tpu.memory_space<vmem>>, vector<512x512xf32>
    %cst = arith.constant dense<0.000000e+00> : vector<196x512xf32>
    %2 = tpu.matmul %0, %1, %cst {dimension_numbers = #tpu.dot_dimension_numbers<[1], [0], [0], [1], [0, 0, 1, 1], [], []>} : vector<196x512xf32>, vector<512x512xf32>, vector<196x512xf32> -> vector<196x512xf32>
    %c0_3 = arith.constant 0 : index
    %c0_4 = arith.constant 0 : index
    %3 = vector.load %arg3[%c0_3, %c0_4] : memref<1x512xf32, #tpu.memory_space<vmem>>, vector<1x512xf32>
    %4 = vector.broadcast %3 : vector<1x512xf32> to vector<196x512xf32>
    %5 = arith.addf %2, %4 : vector<196x512xf32>
    %cst_5 = arith.constant 0.707106769 : f32
    %6 = vector.broadcast %cst_5 : f32 to vector<196x512xf32>
    %7 = arith.mulf %5, %6 : vector<196x512xf32>
    %8 = math.erf %7 : vector<196x512xf32>
    %cst_6 = arith.constant 5.000000e-01 : f32
    %9 = vector.broadcast %cst_6 : f32 to vector<196x512xf32>
    %10 = arith.mulf %9, %8 : vector<196x512xf32>
    %cst_7 = arith.constant 5.000000e-01 : f32
    %11 = vector.broadcast %cst_7 : f32 to vector<196x512xf32>
    %12 = arith.addf %11, %10 : vector<196x512xf32>
    %13 = arith.mulf %5, %12 : vector<196x512xf32>
    %c0_8 = arith.constant 0 : index
    %c0_9 = arith.constant 0 : index
    %14 = vector.load %arg4[%c0_8, %c0_9] : memref<196x512xf32, #tpu.memory_space<vmem>>, vector<196x512xf32>
    tpu.vector_store %arg4[%c0_8, %c0_9], %13 {strides = array<i32>} : memref<196x512xf32, #tpu.memory_space<vmem>>, vector<196x512xf32>,
    return
  }
  func.func @transform_0(%arg0: i32) -> (i32, i32) {
    %c0_i32 = arith.constant 0 : i32
    %c0_i32_0 = arith.constant 0 : i32
    %c0_i32_1 = arith.constant 0 : i32
    return %c0_i32, %c0_i32_0 : i32, i32
  }
  func.func @transform_1(%arg0: i32) -> (i32, i32) {
    %c0_i32 = arith.constant 0 : i32
    %c0_i32_0 = arith.constant 0 : i32
    return %c0_i32, %arg0 : i32, i32
  }
  func.func @transform_2(%arg0: i32) -> (i32, i32) {
    %c0_i32 = arith.constant 0 : i32
    %c0_i32_0 = arith.constant 0 : i32
    return %c0_i32, %arg0 : i32, i32
  }
  func.func @transform_3(%arg0: i32) -> (i32, i32) {
    %c0_i32 = arith.constant 0 : i32
    %c0_i32_0 = arith.constant 0 : i32
    return %c0_i32, %arg0 : i32, i32
  }
}

</mosaic_0001>

<llo_original>
// kernel: tpu_custom_call.1
$region0: #{tpu_custom_call.1}
  #allocation0 [shape = 'u32[]', space=smem, size = 0x4, offset = 0x4, fixed_abs, tag = 'smem constant byte address 0x4 - core index']
  #allocation1 [shape = 'u32[144,128]{1,0:T(1,128)}', space=vmem, size = 0x12000, scoped, tag = 'internal scratch']
  %s0 = inlined_call_operand.hbm [shape: f32[196,512], index: 0, kind: input, shape index: {}]
  %s1 = inlined_call_operand.hbm [shape: f32[512,2048], index: 1, kind: input, shape index: {}]
  %s2 = inlined_call_operand.hbm [shape: f32[1,2048], index: 2, kind: input, shape index: {}]
  %s3 = inlined_call_operand.hbm [shape: f32[196,2048], index: 3, kind: output, shape index: {}]
  %s4 = sld [smem:[#allocation0]]
  $region57: #{tpu_custom_call.1} parent=0
    _
  %s6 = ssub.s32 1, %s4
  %s7 = scalar_select 0, %s6, %s4
  $region1: #{tpu_custom_call.1} parent=0
    #allocation2 [shape = 'u8[409600]{0}', space=vmem, size = 0x64000, scoped, tag = 'input window, operand 0, single buffered']
    #allocation3 [shape = 's32[2]{0}', space=sflag, size = 0x8, scoped, tag = 'scoped memory for tpu_custom_call.1']
    #allocation4 [shape = 's32[2]{0}', space=sflag, size = 0x8, scoped, tag = 'scoped memory for tpu_custom_call.1']
    #allocation5 [shape = 'u8[2097152]{0}', space=vmem, size = 0x200000, scoped, tag = 'input window, operand 1']
    #allocation6 [shape = 's32[2]{0}', space=sflag, size = 0x8, scoped, tag = 'scoped memory for tpu_custom_call.1']
    #allocation7 [shape = 'u8[4096]{0}', space=vmem, size = 0x1000, scoped, tag = 'input window, operand 2']
    #allocation8 [shape = 'u8[819200]{0}', space=vmem, size = 0xc8000, scoped, tag = 'output window, operand 0']
    %8 = vsyncpa [#allocation3], 0
    %9 = vsyncpa [#allocation6], 0
    %s10 = scalar_lea.sflag [#allocation6], 1
    %11 = vsyncpa %s10, 0
    %12 = vsyncpa [#allocation4], 0
    %s13 = scalar_lea.sflag [#allocation4], 1
    %14 = vsyncpa %s13, 0
    loop: start=0, step=1, limit=6
    $region2: #{tpu_custom_call.1} parent=1 // loop_pre_header
      _
    $region3: #{tpu_custom_call.1} parent=1 // loop_header
      %s16 = sphi 0, %s20
      %p17 = scmp.ge.s32.totalorder %s16, 6
      %s24 = sphi 0, %s24
      %s26 = sphi 0, %s24
      %s27 = sphi 0, %s26
      %s41 = sphi 0, %s27
      %s47 = sphi 0, %s49
      %s50 = sphi 0, %s47
      %s51 = sphi 0, %s50
      %s67 = sphi 0, %s51
      %s73 = sphi 0, %s75
      %s76 = sphi 0, %s73
      %s77 = sphi 0, %s76
      %s93 = sphi 0, %s77
      %s99 = sphi 0, %s101
      %s102 = sphi 0, %s99
      %s103 = sphi 0, %s102
      %s119 = sphi 0, %s103
    $region4: #{tpu_custom_call.1} parent=1 // loop_header_branch
      %19 = sbr.rel (%p17) target = $region8
    $region5: #{tpu_custom_call.1} parent=1 // loop_body
      %s21 = ssub.s32 %s16, 1
      %s22 = ssub.s32 %s16, 2
      %s23 = sadd.s32 %s16, 1
      %s25 = sadd.s32 %s24, 1
      %p28 = scmp.eq.s32.totalorder %s16, 3
      %p29 = scmp.ne.s32.totalorder %s24, %s26
      %p30 = scmp.eq.s32.totalorder %s16, 0
      %p31 = por %p29, %p30
      %p32 = scmp.ne.s32.totalorder %s24, %s26
      %p33 = scmp.eq.s32.totalorder %s21, 3
      %p34 = por %p32, %p33
      %p35 = scmp.ne.s32.totalorder %s26, %s27
      %p36 = scmp.eq.s32.totalorder %s21, 0
      %p37 = por %p35, %p36
      %p38 = scmp.ne.s32.totalorder %s26, %s27
      %p39 = scmp.eq.s32.totalorder %s22, 3
      %p40 = por %p38, %p39
      %p42 = scmp.ne.s32.totalorder %s27, %s41
      %p43 = scmp.eq.s32.totalorder %s22, 0
      %p44 = por %p42, %p43
      %s45 = ssub.s32 %s16, %s23
      %p46 = scmp.eq.s32.totalorder %s45, 0
      %s48 = sadd.s32 %s47, 1
      %s49 = scalar_select %p46, %s47, %s48
      %p52 = pneg %p46
      %p53 = scmp.eq.s32.totalorder %s16, 3
      %p54 = por %p52, %p53
      %p55 = scmp.ne.s32.totalorder %s47, %s50
      %p56 = scmp.eq.s32.totalorder %s16, 0
      %p57 = por %p55, %p56
      %p58 = scmp.ne.s32.totalorder %s47, %s50
      %p59 = scmp.eq.s32.totalorder %s21, 3
      %p60 = por %p58, %p59
      %p61 = scmp.ne.s32.totalorder %s50, %s51
      %p62 = scmp.eq.s32.totalorder %s21, 0
      %p63 = por %p61, %p62
      %p64 = scmp.ne.s32.totalorder %s50, %s51
      %p65 = scmp.eq.s32.totalorder %s22, 3
      %p66 = por %p64, %p65
      %p68 = scmp.ne.s32.totalorder %s51, %s67
      %p69 = scmp.eq.s32.totalorder %s22, 0
      %p70 = por %p68, %p69
      %s71 = ssub.s32 %s16, %s23
      %p72 = scmp.eq.s32.totalorder %s71, 0
      %s74 = sadd.s32 %s73, 1
      %s75 = scalar_select %p72, %s73, %s74
      %p78 = pneg %p72
      %p79 = scmp.eq.s32.totalorder %s16, 3
      %p80 = por %p78, %p79
      %p81 = scmp.ne.s32.totalorder %s73, %s76
      %p82 = scmp.eq.s32.totalorder %s16, 0
      %p83 = por %p81, %p82
      %p84 = scmp.ne.s32.totalorder %s73, %s76
      %p85 = scmp.eq.s32.totalorder %s21, 3
      %p86 = por %p84, %p85
      %p87 = scmp.ne.s32.totalorder %s76, %s77
      %p88 = scmp.eq.s32.totalorder %s21, 0
      %p89 = por %p87, %p88
      %p90 = scmp.ne.s32.totalorder %s76, %s77
      %p91 = scmp.eq.s32.totalorder %s22, 3
      %p92 = por %p90, %p91
      %p94 = scmp.ne.s32.totalorder %s77, %s93
      %p95 = scmp.eq.s32.totalorder %s22, 0
      %p96 = por %p94, %p95
      %s97 = ssub.s32 %s16, %s23
      %p98 = scmp.eq.s32.totalorder %s97, 0
      %s100 = sadd.s32 %s99, 1
      %s101 = scalar_select %p98, %s99, %s100
      %p104 = pneg %p98
      %p105 = scmp.eq.s32.totalorder %s16, 3
      %p106 = por %p104, %p105
      %p107 = scmp.ne.s32.totalorder %s99, %s102
      %p108 = scmp.eq.s32.totalorder %s16, 0
      %p109 = por %p107, %p108
      %p110 = scmp.ne.s32.totalorder %s99, %s102
      %p111 = scmp.eq.s32.totalorder %s21, 3
      %p112 = por %p110, %p111
      %p113 = scmp.ne.s32.totalorder %s102, %s103
      %p114 = scmp.eq.s32.totalorder %s21, 0
      %p115 = por %p113, %p114
      %p116 = scmp.ne.s32.totalorder %s102, %s103
      %p117 = scmp.eq.s32.totalorder %s22, 3
      %p118 = por %p116, %p117
      %p120 = scmp.ne.s32.totalorder %s103, %s119
      %p121 = scmp.eq.s32.totalorder %s22, 0
      %p122 = por %p120, %p121
      %p123 = scmp.le.s32.totalorder 1, %s16
      %p124 = scmp.lt.s32.totalorder %s16, 5
      %p125 = pnand %p123, %p124
      %p126 = pneg %p125
      // Predicated region
      $region9: #{tpu_custom_call.1} parent=5 // pred_check
        _
      $region10: #{tpu_custom_call.1} parent=5 // pred_check_branch
        %128 = sbr.rel (%p125) target = $region12
      $region11: #{tpu_custom_call.1} parent=5 // pred_region
        %s129 = ssub.s32 %s16, 1
        // Predicated region
        $region13: #{tpu_custom_call.1} parent=11 // pred_check
          %p130 = pneg %p37
        $region14: #{tpu_custom_call.1} parent=11 // pred_check_branch
          %132 = sbr.rel (%p130) target = $region16
        $region15: #{tpu_custom_call.1} parent=11 // pred_region
          %s134 = ssub.s32 12800, 12800
          %135 = vsyncadd [#allocation3], %s134
          %s136 = sshll.u32 [#allocation2], 4
          %s137 = int_to_ptr.vmem [resolvable:$true] %s136
          %142 = dma.hbm_to_vmem [thread:$0]  %s0, 12800, %s137, [#allocation3], 512, 512, 32
        $region16: #{tpu_custom_call.1} parent=11 // pred_fallthru
          _
      $region12: #{tpu_custom_call.1} parent=5 // pred_fallthru
        _
      %p143 = scmp.lt.s32.totalorder %s16, 4
      // Predicated region
      $region17: #{tpu_custom_call.1} parent=5 // pred_check
        %p144 = pneg %p143
      $region18: #{tpu_custom_call.1} parent=5 // pred_check_branch
        %146 = sbr.rel (%p144) target = $region20
      $region19: #{tpu_custom_call.1} parent=5 // pred_region
        // Predicated region
        $region21: #{tpu_custom_call.1} parent=19 // pred_check
          %p147 = pneg %p57
        $region22: #{tpu_custom_call.1} parent=19 // pred_check_branch
          %149 = sbr.rel (%p147) target = $region24
        $region23: #{tpu_custom_call.1} parent=19 // pred_region
          %s150 = sand.u32 %s16, 1
          %s151 = scalar_lea.sflag [#allocation6], %s150
          %s152 = sand.u32 %s47, 1
          %s153 = smul.addr %s152, 2048
          %s154 = scalar_lea.vmem [#allocation5], %s153
          %s155 = smul.u32 4, %s16
          %s157 = ssub.s32 32768, 32768
          %158 = vsyncadd %s151, %s157
          %s159 = smul.addr %s155, 128
          %s160 = scalar_lea.hbm %s1, %s159
          %s161 = sshll.u32 %s154, 4
          %s162 = int_to_ptr.vmem [resolvable:$true] %s161
          %167 = dma.hbm_to_vmem [thread:$0]  %s160, 32768, %s162, %s151, 2048, 512, 32
        $region24: #{tpu_custom_call.1} parent=19 // pred_fallthru
          _
        // Predicated region
        $region25: #{tpu_custom_call.1} parent=19 // pred_check
          %p168 = pneg %p83
        $region26: #{tpu_custom_call.1} parent=19 // pred_check_branch
          %170 = sbr.rel (%p168) target = $region28
        $region27: #{tpu_custom_call.1} parent=19 // pred_region
          %s171 = sand.u32 %s16, 1
          %s172 = scalar_lea.sflag [#allocation6], %s171
          %s173 = sand.u32 %s73, 1
          %s174 = smul.addr %s173, 4
          %s175 = scalar_lea.vmem [#allocation7], %s174
          %s176 = smul.u32 4, %s16
          %s178 = ssub.s32 64, 64
          %179 = vsyncadd %s172, %s178
          %s180 = smul.addr %s176, 16
          %s181 = scalar_lea.hbm %s2, %s180
          %s183 = sshll.u32 %s175, 4
          %s184 = int_to_ptr.vmem [resolvable:$true] %s183
          %186 = dma.hbm_to_vmem [thread:$0]  %s181, 64, %s184, %s172
        $region28: #{tpu_custom_call.1} parent=19 // pred_fallthru
          _
      $region20: #{tpu_custom_call.1} parent=5 // pred_fallthru
        _
      %p187 = scmp.le.s32.totalorder 1, %s16
      %p188 = scmp.lt.s32.totalorder %s16, 5
      %p189 = pnand %p187, %p188
      %p190 = pneg %p189
      // Predicated region
      $region29: #{tpu_custom_call.1} parent=5 // pred_check
        _
      $region30: #{tpu_custom_call.1} parent=5 // pred_check_branch
        %192 = sbr.rel (%p189) target = $region32
      $region31: #{tpu_custom_call.1} parent=5 // pred_region
        %s193 = ssub.s32 %s16, 1
        // Predicated region
        $region33: #{tpu_custom_call.1} parent=31 // pred_check
          %p194 = pneg %p37
        $region34: #{tpu_custom_call.1} parent=31 // pred_check_branch
          %196 = sbr.rel (%p194) target = $region36
        $region35: #{tpu_custom_call.1} parent=31 // pred_region
          %197 = dma.done [#allocation3], 12800
        $region36: #{tpu_custom_call.1} parent=31 // pred_fallthru
          _
        %s198 = sand.u32 %s21, 1
        %s199 = scalar_lea.sflag [#allocation6], %s198
        %s200 = sand.u32 %s50, 1
        %s201 = smul.addr %s200, 2048
        %s202 = scalar_lea.vmem [#allocation5], %s201
        // Predicated region
        $region37: #{tpu_custom_call.1} parent=31 // pred_check
          %p203 = pneg %p63
        $region38: #{tpu_custom_call.1} parent=31 // pred_check_branch
          %205 = sbr.rel (%p203) target = $region40
        $region39: #{tpu_custom_call.1} parent=31 // pred_region
          %206 = dma.done %s199, 32768
        $region40: #{tpu_custom_call.1} parent=31 // pred_fallthru
          _
        %s207 = sand.u32 %s21, 1
        %s208 = scalar_lea.sflag [#allocation6], %s207
        %s209 = sand.u32 %s76, 1
        %s210 = smul.addr %s209, 4
        %s211 = scalar_lea.vmem [#allocation7], %s210
        // Predicated region
        $region41: #{tpu_custom_call.1} parent=31 // pred_check
          %p212 = pneg %p89
        $region42: #{tpu_custom_call.1} parent=31 // pred_check_branch
          %214 = sbr.rel (%p212) target = $region44
        $region43: #{tpu_custom_call.1} parent=31 // pred_region
          %215 = dma.done %s208, 64
        $region44: #{tpu_custom_call.1} parent=31 // pred_fallthru
          _
        %p216 = pneg %p37
        %p217 = pneg %p34
        %s218 = sand.u32 %s21, 1
        %s219 = scalar_lea.sflag [#allocation6], %s218
        %s220 = sand.u32 %s50, 1
        %s221 = smul.addr %s220, 2048
        %s222 = scalar_lea.vmem [#allocation5], %s221
        %p223 = pneg %p63
        %p224 = pneg %p60
        %s225 = sand.u32 %s21, 1
        %s226 = scalar_lea.sflag [#allocation6], %s225
        %s227 = sand.u32 %s76, 1
        %s228 = smul.addr %s227, 4
        %s229 = scalar_lea.vmem [#allocation7], %s228
        %p230 = pneg %p89
        %p231 = pneg %p86
        %p232 = pneg %p115
        %p233 = pneg %p112
        %s234 = sand.u32 %s102, 1
        %s235 = scalar_lea.sflag [#allocation4], %s234
        %s236 = sand.u32 %s102, 1
        %s237 = smul.addr %s236, 800
        %s238 = scalar_lea.vmem [#allocation8], %s237
        %s239 = smul.u32 4, %s21
        %s240 = smul.u32 4, %s21
        %s241 = smul.u32 4, %s21
        %v242 = vld [vmem:[#allocation2] sm:$0xff]
        %v243 = vld [vmem:[#allocation2 + $0x8] sm:$0xff]
        %v244 = vld [vmem:[#allocation2 + $0x10] sm:$0xff]
        %v245 = vld [vmem:[#allocation2 + $0x18] sm:$0xff]
        %v246 = vld [vmem:[#allocation2 + $0x20] sm:$0xff]
        %v247 = vld [vmem:[#allocation2 + $0x28] sm:$0xff]
        %v248 = vld [vmem:[#allocation2 + $0x30] sm:$0xff]
        %v249 = vld [vmem:[#allocation2 + $0x38] sm:$0xff]
        %v250 = vld [vmem:[#allocation2 + $0x40] sm:$0xff]
        %v251 = vld [vmem:[#allocation2 + $0x48] sm:$0xff]
        %v252 = vld [vmem:[#allocation2 + $0x50] sm:$0xff]
        %v253 = vld [vmem:[#allocation2 + $0x58] sm:$0xff]
        %v254 = vld [vmem:[#allocation2 + $0x60] sm:$0xff]
        %v255 = vld [vmem:[#allocation2 + $0x68] sm:$0xff]
        %v256 = vld [vmem:[#allocation2 + $0x70] sm:$0xff]
        %v257 = vld [vmem:[#allocation2 + $0x78] sm:$0xff]
        %v258 = vld [vmem:[#allocation2 + $0x80] sm:$0xff]
        %v259 = vld [vmem:[#allocation2 + $0x88] sm:$0xff]
        %v260 = vld [vmem:[#allocation2 + $0x90] sm:$0xff]
        %v261 = vld [vmem:[#allocation2 + $0x98] sm:$0xff]
        %v262 = vld [vmem:[#allocation2 + $0xa0] sm:$0xff]
        %v263 = vld [vmem:[#allocation2 + $0xa8] sm:$0xff]
        %v264 = vld [vmem:[#allocation2 + $0xb0] sm:$0xff]
        %v265 = vld [vmem:[#allocation2 + $0xb8] sm:$0xff]
        %v266 = vld [vmem:[#allocation2 + $0xc0] sm:$0xff]
        %v267 = vld [vmem:[#allocation2 + $0xc8] sm:$0xff]
        %v268 = vld [vmem:[#allocation2 + $0xd0] sm:$0xff]
        %v269 = vld [vmem:[#allocation2 + $0xd8] sm:$0xff]
        %v270 = vld [vmem:[#allocation2 + $0xe0] sm:$0xff]
        %v271 = vld [vmem:[#allocation2 + $0xe8] sm:$0xff]
        %v272 = vld [vmem:[#allocation2 + $0xf0] sm:$0xff]
        %v273 = vld [vmem:[#allocation2 + $0xf8] sm:$0xff]
        %v274 = vld [vmem:[#allocation2 + $0x100] sm:$0xff]
        %v275 = vld [vmem:[#allocation2 + $0x108] sm:$0xff]
        %v276 = vld [vmem:[#allocation2 + $0x110] sm:$0xff]
        %v277 = vld [vmem:[#allocation2 + $0x118] sm:$0xff]
        %v278 = vld [vmem:[#allocation2 + $0x120] sm:$0xff]
        %v279 = vld [vmem:[#allocation2 + $0x128] sm:$0xff]
        %v280 = vld [vmem:[#allocation2 + $0x130] sm:$0xff]
        %v281 = vld [vmem:[#allocation2 + $0x138] sm:$0xff]
        %v282 = vld [vmem:[#allocation2 + $0x140] sm:$0xff]
        %v283 = vld [vmem:[#allocation2 + $0x148] sm:$0xff]
        %v284 = vld [vmem:[#allocation2 + $0x150] sm:$0xff]
        %v285 = vld [vmem:[#allocation2 + $0x158] sm:$0xff]
        %v286 = vld [vmem:[#allocation2 + $0x160] sm:$0xff]
        %v287 = vld [vmem:[#allocation2 + $0x168] sm:$0xff]
        %v288 = vld [vmem:[#allocation2 + $0x170] sm:$0xff]
        %v289 = vld [vmem:[#allocation2 + $0x178] sm:$0xff]
        %v290 = vld [vmem:[#allocation2 + $0x180] sm:$0xff]
        %v291 = vld [vmem:[#allocation2 + $0x188] sm:$0xff]
        %v292 = vld [vmem:[#allocation2 + $0x190] sm:$0xff]
        %v293 = vld [vmem:[#allocation2 + $0x198] sm:$0xff]
        %v294 = vld [vmem:[#allocation2 + $0x1a0] sm:$0xff]
        %v295 = vld [vmem:[#allocation2 + $0x1a8] sm:$0xff]
        %v296 = vld [vmem:[#allocation2 + $0x1b0] sm:$0xff]
        %v297 = vld [vmem:[#allocation2 + $0x1b8] sm:$0xff]
        %v298 = vld [vmem:[#allocation2 + $0x1c0] sm:$0xff]
        %v299 = vld [vmem:[#allocation2 + $0x1c8] sm:$0xff]
        %v300 = vld [vmem:[#allocation2 + $0x1d0] sm:$0xff]
        %v301 = vld [vmem:[#allocation2 + $0x1d8] sm:$0xff]
        %v302 = vld [vmem:[#allocation2 + $0x1e0] sm:$0xff]
        %v303 = vld [vmem:[#allocation2 + $0x1e8] sm:$0xff]
        %v304 = vld [vmem:[#allocation2 + $0x1f0] sm:$0xff]
        %v305 = vld [vmem:[#allocation2 + $0x1f8] sm:$0xff]
        %v306 = vld [vmem:[#allocation2 + $0x200] sm:$0xff]
        %v307 = vld [vmem:[#allocation2 + $0x208] sm:$0xff]
        %v308 = vld [vmem:[#allocation2 + $0x210] sm:$0xff]
        %v309 = vld [vmem:[#allocation2 + $0x218] sm:$0xff]
        %v310 = vld [vmem:[#allocation2 + $0x220] sm:$0xff]
        %v311 = vld [vmem:[#allocation2 + $0x228] sm:$0xff]
        %v312 = vld [vmem:[#allocation2 + $0x230] sm:$0xff]
        %v313 = vld [vmem:[#allocation2 + $0x238] sm:$0xff]
        %v314 = vld [vmem:[#allocation2 + $0x240] sm:$0xff]
        %v315 = vld [vmem:[#allocation2 + $0x248] sm:$0xff]
        %v316 = vld [vmem:[#allocation2 + $0x250] sm:$0xff]
        %v317 = vld [vmem:[#allocation2 + $0x258] sm:$0xff]
        %v318 = vld [vmem:[#allocation2 + $0x260] sm:$0xff]
        %v319 = vld [vmem:[#allocation2 + $0x268] sm:$0xff]
        %v320 = vld [vmem:[#allocation2 + $0x270] sm:$0xff]
        %v321 = vld [vmem:[#allocation2 + $0x278] sm:$0xff]
        %v322 = vld [vmem:[#allocation2 + $0x280] sm:$0xff]
        %v323 = vld [vmem:[#allocation2 + $0x288] sm:$0xff]
        %v324 = vld [vmem:[#allocation2 + $0x290] sm:$0xff]
        %v325 = vld [vmem:[#allocation2 + $0x298] sm:$0xff]
        %v326 = vld [vmem:[#allocation2 + $0x2a0] sm:$0xff]
        %v327 = vld [vmem:[#allocation2 + $0x2a8] sm:$0xff]
        %v328 = vld [vmem:[#allocation2 + $0x2b0] sm:$0xff]
        %v329 = vld [vmem:[#allocation2 + $0x2b8] sm:$0xff]
        %v330 = vld [vmem:[#allocation2 + $0x2c0] sm:$0xff]
        %v331 = vld [vmem:[#allocation2 + $0x2c8] sm:$0xff]
        %v332 = vld [vmem:[#allocation2 + $0x2d0] sm:$0xff]
        %v333 = vld [vmem:[#allocation2 + $0x2d8] sm:$0xff]
        %v334 = vld [vmem:[#allocation2 + $0x2e0] sm:$0xff]
        %v335 = vld [vmem:[#allocation2 + $0x2e8] sm:$0xff]
        %v336 = vld [vmem:[#allocation2 + $0x2f0] sm:$0xff]
        %v337 = vld [vmem:[#allocation2 + $0x2f8] sm:$0xff]
        %v338 = vld [vmem:[#allocation2 + $0x300] sm:$0xf]
        %v339 = vld [vmem:[#allocation2 + $0x308] sm:$0xf]
        %v340 = vld [vmem:[#allocation2 + $0x310] sm:$0xf]
        %v341 = vld [vmem:[#allocation2 + $0x318] sm:$0xf]
        %v342 = vld [vmem:[%s202] sm:$0xff]
        %v343 = vld [vmem:[%s202 + $0x8] sm:$0xff]
        %v344 = vld [vmem:[%s202 + $0x10] sm:$0xff]
        %v345 = vld [vmem:[%s202 + $0x18] sm:$0xff]
        %v346 = vld [vmem:[%s202 + $0x20] sm:$0xff]
        %v347 = vld [vmem:[%s202 + $0x28] sm:$0xff]
        %v348 = vld [vmem:[%s202 + $0x30] sm:$0xff]
        %v349 = vld [vmem:[%s202 + $0x38] sm:$0xff]
        %v350 = vld [vmem:[%s202 + $0x40] sm:$0xff]
        %v351 = vld [vmem:[%s202 + $0x48] sm:$0xff]
        %v352 = vld [vmem:[%s202 + $0x50] sm:$0xff]
        %v353 = vld [vmem:[%s202 + $0x58] sm:$0xff]
        %v354 = vld [vmem:[%s202 + $0x60] sm:$0xff]
        %v355 = vld [vmem:[%s202 + $0x68] sm:$0xff]
        %v356 = vld [vmem:[%s202 + $0x70] sm:$0xff]
        %v357 = vld [vmem:[%s202 + $0x78] sm:$0xff]
        %v358 = vld [vmem:[%s202 + $0x80] sm:$0xff]
        %v359 = vld [vmem:[%s202 + $0x88] sm:$0xff]
        %v360 = vld [vmem:[%s202 + $0x90] sm:$0xff]
        %v361 = vld [vmem:[%s202 + $0x98] sm:$0xff]
        %v362 = vld [vmem:[%s202 + $0xa0] sm:$0xff]
        %v363 = vld [vmem:[%s202 + $0xa8] sm:$0xff]
        %v364 = vld [vmem:[%s202 + $0xb0] sm:$0xff]
        %v365 = vld [vmem:[%s202 + $0xb8] sm:$0xff]
        %v366 = vld [vmem:[%s202 + $0xc0] sm:$0xff]
        %v367 = vld [vmem:[%s202 + $0xc8] sm:$0xff]
        %v368 = vld [vmem:[%s202 + $0xd0] sm:$0xff]
        %v369 = vld [vmem:[%s202 + $0xd8] sm:$0xff]
        %v370 = vld [vmem:[%s202 + $0xe0] sm:$0xff]
        %v371 = vld [vmem:[%s202 + $0xe8] sm:$0xff]
        %v372 = vld [vmem:[%s202 + $0xf0] sm:$0xff]
        %v373 = vld [vmem:[%s202 + $0xf8] sm:$0xff]
        %v374 = vld [vmem:[%s202 + $0x100] sm:$0xff]
        %v375 = vld [vmem:[%s202 + $0x108] sm:$0xff]
        %v376 = vld [vmem:[%s202 + $0x110] sm:$0xff]
        %v377 = vld [vmem:[%s202 + $0x118] sm:$0xff]
        %v378 = vld [vmem:[%s202 + $0x120] sm:$0xff]
        %v379 = vld [vmem:[%s202 + $0x128] sm:$0xff]
        %v380 = vld [vmem:[%s202 + $0x130] sm:$0xff]
        %v381 = vld [vmem:[%s202 + $0x138] sm:$0xff]
        %v382 = vld [vmem:[%s202 + $0x140] sm:$0xff]
        %v383 = vld [vmem:[%s202 + $0x148] sm:$0xff]
        %v384 = vld [vmem:[%s202 + $0x150] sm:$0xff]
        %v385 = vld [vmem:[%s202 + $0x158] sm:$0xff]
        %v386 = vld [vmem:[%s202 + $0x160] sm:$0xff]
        %v387 = vld [vmem:[%s202 + $0x168] sm:$0xff]
        %v388 = vld [vmem:[%s202 + $0x170] sm:$0xff]
        %v389 = vld [vmem:[%s202 + $0x178] sm:$0xff]
        %v390 = vld [vmem:[%s202 + $0x180] sm:$0xff]
        %v391 = vld [vmem:[%s202 + $0x188] sm:$0xff]
        %v392 = vld [vmem:[%s202 + $0x190] sm:$0xff]
        %v393 = vld [vmem:[%s202 + $0x198] sm:$0xff]
        %v394 = vld [vmem:[%s202 + $0x1a0] sm:$0xff]
        %v395 = vld [vmem:[%s202 + $0x1a8] sm:$0xff]
        %v396 = vld [vmem:[%s202 + $0x1b0] sm:$0xff]
        %v397 = vld [vmem:[%s202 + $0x1b8] sm:$0xff]
        %v398 = vld [vmem:[%s202 + $0x1c0] sm:$0xff]
        %v399 = vld [vmem:[%s202 + $0x1c8] sm:$0xff]
        %v400 = vld [vmem:[%s202 + $0x1d0] sm:$0xff]
        %v401 = vld [vmem:[%s202 + $0x1d8] sm:$0xff]
        %v402 = vld [vmem:[%s202 + $0x1e0] sm:$0xff]
        %v403 = vld [vmem:[%s202 + $0x1e8] sm:$0xff]
        %v404 = vld [vmem:[%s202 + $0x1f0] sm:$0xff]
        %v405 = vld [vmem:[%s202 + $0x1f8] sm:$0xff]
        %v406 = vld [vmem:[%s202 + $0x200] sm:$0xff]
        %v407 = vld [vmem:[%s202 + $0x208] sm:$0xff]
        %v408 = vld [vmem:[%s202 + $0x210] sm:$0xff]
        %v409 = vld [vmem:[%s202 + $0x218] sm:$0xff]
        %v410 = vld [vmem:[%s202 + $0x220] sm:$0xff]
        %v411 = vld [vmem:[%s202 + $0x228] sm:$0xff]
        %v412 = vld [vmem:[%s202 + $0x230] sm:$0xff]
        %v413 = vld [vmem:[%s202 + $0x238] sm:$0xff]
        %v414 = vld [vmem:[%s202 + $0x240] sm:$0xff]
        %v415 = vld [vmem:[%s202 + $0x248] sm:$0xff]
        %v416 = vld [vmem:[%s202 + $0x250] sm:$0xff]
        %v417 = vld [vmem:[%s202 + $0x258] sm:$0xff]
        %v418 = vld [vmem:[%s202 + $0x260] sm:$0xff]
        %v419 = vld [vmem:[%s202 + $0x268] sm:$0xff]
        %v420 = vld [vmem:[%s202 + $0x270] sm:$0xff]
        %v421 = vld [vmem:[%s202 + $0x278] sm:$0xff]
        %v422 = vld [vmem:[%s202 + $0x280] sm:$0xff]
        %v423 = vld [vmem:[%s202 + $0x288] sm:$0xff]
        %v424 = vld [vmem:[%s202 + $0x290] sm:$0xff]
        %v425 = vld [vmem:[%s202 + $0x298] sm:$0xff]
        %v426 = vld [vmem:[%s202 + $0x2a0] sm:$0xff]
        %v427 = vld [vmem:[%s202 + $0x2a8] sm:$0xff]
        %v428 = vld [vmem:[%s202 + $0x2b0] sm:$0xff]
        %v429 = vld [vmem:[%s202 + $0x2b8] sm:$0xff]
        %v430 = vld [vmem:[%s202 + $0x2c0] sm:$0xff]
        %v431 = vld [vmem:[%s202 + $0x2c8] sm:$0xff]
        %v432 = vld [vmem:[%s202 + $0x2d0] sm:$0xff]
        %v433 = vld [vmem:[%s202 + $0x2d8] sm:$0xff]
        %v434 = vld [vmem:[%s202 + $0x2e0] sm:$0xff]
        %v435 = vld [vmem:[%s202 + $0x2e8] sm:$0xff]
        %v436 = vld [vmem:[%s202 + $0x2f0] sm:$0xff]
        %v437 = vld [vmem:[%s202 + $0x2f8] sm:$0xff]
        %v438 = vld [vmem:[%s202 + $0x300] sm:$0xff]
        %v439 = vld [vmem:[%s202 + $0x308] sm:$0xff]
        %v440 = vld [vmem:[%s202 + $0x310] sm:$0xff]
        %v441 = vld [vmem:[%s202 + $0x318] sm:$0xff]
        %v442 = vld [vmem:[%s202 + $0x320] sm:$0xff]
        %v443 = vld [vmem:[%s202 + $0x328] sm:$0xff]
        %v444 = vld [vmem:[%s202 + $0x330] sm:$0xff]
        %v445 = vld [vmem:[%s202 + $0x338] sm:$0xff]
        %v446 = vld [vmem:[%s202 + $0x340] sm:$0xff]
        %v447 = vld [vmem:[%s202 + $0x348] sm:$0xff]
        %v448 = vld [vmem:[%s202 + $0x350] sm:$0xff]
        %v449 = vld [vmem:[%s202 + $0x358] sm:$0xff]
        %v450 = vld [vmem:[%s202 + $0x360] sm:$0xff]
        %v451 = vld [vmem:[%s202 + $0x368] sm:$0xff]
        %v452 = vld [vmem:[%s202 + $0x370] sm:$0xff]
        %v453 = vld [vmem:[%s202 + $0x378] sm:$0xff]
        %v454 = vld [vmem:[%s202 + $0x380] sm:$0xff]
        %v455 = vld [vmem:[%s202 + $0x388] sm:$0xff]
        %v456 = vld [vmem:[%s202 + $0x390] sm:$0xff]
        %v457 = vld [vmem:[%s202 + $0x398] sm:$0xff]
        %v458 = vld [vmem:[%s202 + $0x3a0] sm:$0xff]
        %v459 = vld [vmem:[%s202 + $0x3a8] sm:$0xff]
        %v460 = vld [vmem:[%s202 + $0x3b0] sm:$0xff]
        %v461 = vld [vmem:[%s202 + $0x3b8] sm:$0xff]
        %v462 = vld [vmem:[%s202 + $0x3c0] sm:$0xff]
        %v463 = vld [vmem:[%s202 + $0x3c8] sm:$0xff]
        %v464 = vld [vmem:[%s202 + $0x3d0] sm:$0xff]
        %v465 = vld [vmem:[%s202 + $0x3d8] sm:$0xff]
        %v466 = vld [vmem:[%s202 + $0x3e0] sm:$0xff]
        %v467 = vld [vmem:[%s202 + $0x3e8] sm:$0xff]
        %v468 = vld [vmem:[%s202 + $0x3f0] sm:$0xff]
        %v469 = vld [vmem:[%s202 + $0x3f8] sm:$0xff]
        %v470 = vld [vmem:[%s202 + $0x400] sm:$0xff]
        %v471 = vld [vmem:[%s202 + $0x408] sm:$0xff]
        %v472 = vld [vmem:[%s202 + $0x410] sm:$0xff]
        %v473 = vld [vmem:[%s202 + $0x418] sm:$0xff]
        %v474 = vld [vmem:[%s202 + $0x420] sm:$0xff]
        %v475 = vld [vmem:[%s202 + $0x428] sm:$0xff]
        %v476 = vld [vmem:[%s202 + $0x430] sm:$0xff]
        %v477 = vld [vmem:[%s202 + $0x438] sm:$0xff]
        %v478 = vld [vmem:[%s202 + $0x440] sm:$0xff]
        %v479 = vld [vmem:[%s202 + $0x448] sm:$0xff]
        %v480 = vld [vmem:[%s202 + $0x450] sm:$0xff]
        %v481 = vld [vmem:[%s202 + $0x458] sm:$0xff]
        %v482 = vld [vmem:[%s202 + $0x460] sm:$0xff]
        %v483 = vld [vmem:[%s202 + $0x468] sm:$0xff]
        %v484 = vld [vmem:[%s202 + $0x470] sm:$0xff]
        %v485 = vld [vmem:[%s202 + $0x478] sm:$0xff]
        %v486 = vld [vmem:[%s202 + $0x480] sm:$0xff]
        %v487 = vld [vmem:[%s202 + $0x488] sm:$0xff]
        %v488 = vld [vmem:[%s202 + $0x490] sm:$0xff]
        %v489 = vld [vmem:[%s202 + $0x498] sm:$0xff]
        %v490 = vld [vmem:[%s202 + $0x4a0] sm:$0xff]
        %v491 = vld [vmem:[%s202 + $0x4a8] sm:$0xff]
        %v492 = vld [vmem:[%s202 + $0x4b0] sm:$0xff]
        %v493 = vld [vmem:[%s202 + $0x4b8] sm:$0xff]
        %v494 = vld [vmem:[%s202 + $0x4c0] sm:$0xff]
        %v495 = vld [vmem:[%s202 + $0x4c8] sm:$0xff]
        %v496 = vld [vmem:[%s202 + $0x4d0] sm:$0xff]
        %v497 = vld [vmem:[%s202 + $0x4d8] sm:$0xff]
        %v498 = vld [vmem:[%s202 + $0x4e0] sm:$0xff]
        %v499 = vld [vmem:[%s202 + $0x4e8] sm:$0xff]
        %v500 = vld [vmem:[%s202 + $0x4f0] sm:$0xff]
        %v501 = vld [vmem:[%s202 + $0x4f8] sm:$0xff]
        %v502 = vld [vmem:[%s202 + $0x500] sm:$0xff]
        %v503 = vld [vmem:[%s202 + $0x508] sm:$0xff]
        %v504 = vld [vmem:[%s202 + $0x510] sm:$0xff]
        %v505 = vld [vmem:[%s202 + $0x518] sm:$0xff]
        %v506 = vld [vmem:[%s202 + $0x520] sm:$0xff]
        %v507 = vld [vmem:[%s202 + $0x528] sm:$0xff]
        %v508 = vld [vmem:[%s202 + $0x530] sm:$0xff]
        %v509 = vld [vmem:[%s202 + $0x538] sm:$0xff]
        %v510 = vld [vmem:[%s202 + $0x540] sm:$0xff]
        %v511 = vld [vmem:[%s202 + $0x548] sm:$0xff]
        %v512 = vld [vmem:[%s202 + $0x550] sm:$0xff]
        %v513 = vld [vmem:[%s202 + $0x558] sm:$0xff]
        %v514 = vld [vmem:[%s202 + $0x560] sm:$0xff]
        %v515 = vld [vmem:[%s202 + $0x568] sm:$0xff]
        %v516 = vld [vmem:[%s202 + $0x570] sm:$0xff]
        %v517 = vld [vmem:[%s202 + $0x578] sm:$0xff]
        %v518 = vld [vmem:[%s202 + $0x580] sm:$0xff]
        %v519 = vld [vmem:[%s202 + $0x588] sm:$0xff]
        %v520 = vld [vmem:[%s202 + $0x590] sm:$0xff]
        %v521 = vld [vmem:[%s202 + $0x598] sm:$0xff]
        %v522 = vld [vmem:[%s202 + $0x5a0] sm:$0xff]
        %v523 = vld [vmem:[%s202 + $0x5a8] sm:$0xff]
        %v524 = vld [vmem:[%s202 + $0x5b0] sm:$0xff]
        %v525 = vld [vmem:[%s202 + $0x5b8] sm:$0xff]
        %v526 = vld [vmem:[%s202 + $0x5c0] sm:$0xff]
        %v527 = vld [vmem:[%s202 + $0x5c8] sm:$0xff]
        %v528 = vld [vmem:[%s202 + $0x5d0] sm:$0xff]
        %v529 = vld [vmem:[%s202 + $0x5d8] sm:$0xff]
        %v530 = vld [vmem:[%s202 + $0x5e0] sm:$0xff]
        %v531 = vld [vmem:[%s202 + $0x5e8] sm:$0xff]
        %v532 = vld [vmem:[%s202 + $0x5f0] sm:$0xff]
        %v533 = vld [vmem:[%s202 + $0x5f8] sm:$0xff]
        %v534 = vld [vmem:[%s202 + $0x600] sm:$0xff]
        %v535 = vld [vmem:[%s202 + $0x608] sm:$0xff]
        %v536 = vld [vmem:[%s202 + $0x610] sm:$0xff]
        %v537 = vld [vmem:[%s202 + $0x618] sm:$0xff]
        %v538 = vld [vmem:[%s202 + $0x620] sm:$0xff]
        %v539 = vld [vmem:[%s202 + $0x628] sm:$0xff]
        %v540 = vld [vmem:[%s202 + $0x630] sm:$0xff]
        %v541 = vld [vmem:[%s202 + $0x638] sm:$0xff]
        %v542 = vld [vmem:[%s202 + $0x640] sm:$0xff]
        %v543 = vld [vmem:[%s202 + $0x648] sm:$0xff]
        %v544 = vld [vmem:[%s202 + $0x650] sm:$0xff]
        %v545 = vld [vmem:[%s202 + $0x658] sm:$0xff]
        %v546 = vld [vmem:[%s202 + $0x660] sm:$0xff]
        %v547 = vld [vmem:[%s202 + $0x668] sm:$0xff]
        %v548 = vld [vmem:[%s202 + $0x670] sm:$0xff]
        %v549 = vld [vmem:[%s202 + $0x678] sm:$0xff]
        %v550 = vld [vmem:[%s202 + $0x680] sm:$0xff]
        %v551 = vld [vmem:[%s202 + $0x688] sm:$0xff]
        %v552 = vld [vmem:[%s202 + $0x690] sm:$0xff]
        %v553 = vld [vmem:[%s202 + $0x698] sm:$0xff]
        %v554 = vld [vmem:[%s202 + $0x6a0] sm:$0xff]
        %v555 = vld [vmem:[%s202 + $0x6a8] sm:$0xff]
        %v556 = vld [vmem:[%s202 + $0x6b0] sm:$0xff]
        %v557 = vld [vmem:[%s202 + $0x6b8] sm:$0xff]
        %v558 = vld [vmem:[%s202 + $0x6c0] sm:$0xff]
        %v559 = vld [vmem:[%s202 + $0x6c8] sm:$0xff]
        %v560 = vld [vmem:[%s202 + $0x6d0] sm:$0xff]
        %v561 = vld [vmem:[%s202 + $0x6d8] sm:$0xff]
        %v562 = vld [vmem:[%s202 + $0x6e0] sm:$0xff]
        %v563 = vld [vmem:[%s202 + $0x6e8] sm:$0xff]
        %v564 = vld [vmem:[%s202 + $0x6f0] sm:$0xff]
        %v565 = vld [vmem:[%s202 + $0x6f8] sm:$0xff]
        %v566 = vld [vmem:[%s202 + $0x700] sm:$0xff]
        %v567 = vld [vmem:[%s202 + $0x708] sm:$0xff]
        %v568 = vld [vmem:[%s202 + $0x710] sm:$0xff]
        %v569 = vld [vmem:[%s202 + $0x718] sm:$0xff]
        %v570 = vld [vmem:[%s202 + $0x720] sm:$0xff]
        %v571 = vld [vmem:[%s202 + $0x728] sm:$0xff]
        %v572 = vld [vmem:[%s202 + $0x730] sm:$0xff]
        %v573 = vld [vmem:[%s202 + $0x738] sm:$0xff]
        %v574 = vld [vmem:[%s202 + $0x740] sm:$0xff]
        %v575 = vld [vmem:[%s202 + $0x748] sm:$0xff]
        %v576 = vld [vmem:[%s202 + $0x750] sm:$0xff]
        %v577 = vld [vmem:[%s202 + $0x758] sm:$0xff]
        %v578 = vld [vmem:[%s202 + $0x760] sm:$0xff]
        %v579 = vld [vmem:[%s202 + $0x768] sm:$0xff]
        %v580 = vld [vmem:[%s202 + $0x770] sm:$0xff]
        %v581 = vld [vmem:[%s202 + $0x778] sm:$0xff]
        %v582 = vld [vmem:[%s202 + $0x780] sm:$0xff]
        %v583 = vld [vmem:[%s202 + $0x788] sm:$0xff]
        %v584 = vld [vmem:[%s202 + $0x790] sm:$0xff]
        %v585 = vld [vmem:[%s202 + $0x798] sm:$0xff]
        %v586 = vld [vmem:[%s202 + $0x7a0] sm:$0xff]
        %v587 = vld [vmem:[%s202 + $0x7a8] sm:$0xff]
        %v588 = vld [vmem:[%s202 + $0x7b0] sm:$0xff]
        %v589 = vld [vmem:[%s202 + $0x7b8] sm:$0xff]
        %v590 = vld [vmem:[%s202 + $0x7c0] sm:$0xff]
        %v591 = vld [vmem:[%s202 + $0x7c8] sm:$0xff]
        %v592 = vld [vmem:[%s202 + $0x7d0] sm:$0xff]
        %v593 = vld [vmem:[%s202 + $0x7d8] sm:$0xff]
        %v594 = vld [vmem:[%s202 + $0x7e0] sm:$0xff]
        %v595 = vld [vmem:[%s202 + $0x7e8] sm:$0xff]
        %v596 = vld [vmem:[%s202 + $0x7f0] sm:$0xff]
        %v597 = vld [vmem:[%s202 + $0x7f8] sm:$0xff]
        %v598 = vld [vmem:[%s211] sm:$0xf]
        %v600 = vlaneseq
        %v601 = vshrl.u32 %v600, 7
        %v602 = vsub.s32 0, %v601
        %v603 = vrot.slane %v598, %v602
        %v604 = vlaneseq
        %v605 = vshrl.u32 %v604, 7
        %v606 = vsub.s32 1, %v605
        %v607 = vrot.slane %v598, %v606
        %v608 = vlaneseq
        %v609 = vshrl.u32 %v608, 7
        %v610 = vsub.s32 2, %v609
        %v611 = vrot.slane %v598, %v610
        %v612 = vlaneseq
        %v613 = vshrl.u32 %v612, 7
        %v614 = vsub.s32 3, %v613
        %v615 = vrot.slane %v598, %v614
        %620 = vmatprep.subr.mxu0 %v343
        %621 = vmatpush1.msra.mxu0 %v342
        %622 = vmatprep.subr.mxu0 %v347
        %623 = vmatpush1.msra.mxu0 %v346
        %624 = vmatprep.subr.mxu0 %v351
        %625 = vmatpush1.msra.mxu0 %v350
        %626 = vmatprep.subr.mxu0 %v355
        %627 = vmatpush1.msra.mxu0 %v354
        %628 = vmatprep.subr.mxu0 %v359
        %629 = vmatpush1.msra.mxu0 %v358
        %630 = vmatprep.subr.mxu0 %v363
        %631 = vmatpush1.msra.mxu0 %v362
        %632 = vmatprep.subr.mxu0 %v367
        %633 = vmatpush1.msra.mxu0 %v366
        %634 = vmatprep.subr.mxu0 %v371
        %635 = vmatpush1.msra.mxu0 %v370
        %636 = vmatprep.subr.mxu0 %v375
        %637 = vmatpush1.msra.mxu0 %v374
        %638 = vmatprep.subr.mxu0 %v379
        %639 = vmatpush1.msra.mxu0 %v378
        %640 = vmatprep.subr.mxu0 %v383
        %641 = vmatpush1.msra.mxu0 %v382
        %642 = vmatprep.subr.mxu0 %v387
        %643 = vmatpush1.msra.mxu0 %v386
        %644 = vmatprep.subr.mxu0 %v391
        %645 = vmatpush1.msra.mxu0 %v390
        %646 = vmatprep.subr.mxu0 %v395
        %647 = vmatpush1.msra.mxu0 %v394
        %648 = vmatprep.subr.mxu0 %v399
        %649 = vmatpush1.msra.mxu0 %v398
        %650 = vmatprep.subr.mxu0 %v403
        %651 = vmatpush1.msra.mxu0 %v402
        %652 = vmatprep.subr.mxu0 %v407
        %653 = vmatpush1.msra.mxu0 %v406
        %654 = vmatprep.subr.mxu0 %v411
        %655 = vmatpush1.msra.mxu0 %v410
        %656 = vmatprep.subr.mxu0 %v415
        %657 = vmatpush1.msra.mxu0 %v414
        %658 = vmatprep.subr.mxu0 %v419
        %659 = vmatpush1.msra.mxu0 %v418
        %660 = vmatprep.subr.mxu0 %v423
        %661 = vmatpush1.msra.mxu0 %v422
        %662 = vmatprep.subr.mxu0 %v427
        %663 = vmatpush1.msra.mxu0 %v426
        %664 = vmatprep.subr.mxu0 %v431
        %665 = vmatpush1.msra.mxu0 %v430
        %666 = vmatprep.subr.mxu0 %v435
        %667 = vmatpush1.msra.mxu0 %v434
        %668 = vmatprep.subr.mxu0 %v439
        %669 = vmatpush1.msra.mxu0 %v438
        %670 = vmatprep.subr.mxu0 %v443
        %671 = vmatpush1.msra.mxu0 %v442
        %672 = vmatprep.subr.mxu0 %v447
        %673 = vmatpush1.msra.mxu0 %v446
        %674 = vmatprep.subr.mxu0 %v451
        %675 = vmatpush1.msra.mxu0 %v450
        %676 = vmatprep.subr.mxu0 %v455
        %677 = vmatpush1.msra.mxu0 %v454
        %678 = vmatprep.subr.mxu0 %v459
        %679 = vmatpush1.msra.mxu0 %v458
        %680 = vmatprep.subr.mxu0 %v463
        %681 = vmatpush1.msra.mxu0 %v462
        %682 = vmatprep.subr.mxu0 %v467
        %683 = vmatpush1.msra.mxu0 %v466
        %684 = vmatprep.mubr.f32.mxu0 %v243
        %685 = vmatmul.mubr.f32.gmra.mrb[0].mxu0 %v242
        %v686 = vpop.f32.mrb[0].mxu0
        %v687 = vadd.f32 %v603, %v686
        %v688 = vpop.f32.mrb[0].mxu0
        %v689 = vadd.f32 %v607, %v688
        %690 = vmatprep.mubr.f32.mxu0 %v247
        %691 = vmatmul.mubr.f32.gmra.mrb[0].mxu0 %v246
        %v692 = vpop.f32.mrb[0].mxu0
        %v693 = vadd.f32 %v603, %v692
        %v694 = vpop.f32.mrb[0].mxu0
        %v695 = vadd.f32 %v607, %v694
        %696 = vmatprep.mubr.f32.mxu0 %v251
        %697 = vmatmul.mubr.f32.gmra.mrb[0].mxu0 %v250
        %v698 = vpop.f32.mrb[0].mxu0
        %v699 = vadd.f32 %v603, %v698
        %v700 = vpop.f32.mrb[0].mxu0
        %v701 = vadd.f32 %v607, %v700
        %702 = vmatprep.mubr.f32.mxu0 %v255
        %703 = vmatmul.mubr.f32.gmra.mrb[0].mxu0 %v254
        %v704 = vpop.f32.mrb[0].mxu0
        %v705 = vadd.f32 %v603, %v704
        %v706 = vpop.f32.mrb[0].mxu0
        %v707 = vadd.f32 %v607, %v706
        %708 = vmatprep.mubr.f32.mxu0 %v259
        %709 = vmatmul.mubr.f32.gmra.mrb[0].mxu0 %v258
        %v710 = vpop.f32.mrb[0].mxu0
        %v711 = vadd.f32 %v603, %v710
        %v712 = vpop.f32.mrb[0].mxu0
        %v713 = vadd.f32 %v607, %v712
        %714 = vmatprep.mubr.f32.mxu0 %v263
        %715 = vmatmul.mubr.f32.gmra.mrb[0].mxu0 %v262
        %v716 = vpop.f32.mrb[0].mxu0
        %v717 = vadd.f32 %v603, %v716
        %v718 = vpop.f32.mrb[0].mxu0
        %v719 = vadd.f32 %v607, %v718
        %720 = vmatprep.mubr.f32.mxu0 %v267
        %721 = vmatmul.mubr.f32.gmra.mrb[0].mxu0 %v266
        %v722 = vpop.f32.mrb[0].mxu0
        %v723 = vadd.f32 %v603, %v722
        %v724 = vpop.f32.mrb[0].mxu0
        %v725 = vadd.f32 %v607, %v724
        %726 = vmatprep.mubr.f32.mxu0 %v271
        %727 = vmatmul.mubr.f32.gmra.mrb[0].mxu0 %v270
        %v728 = vpop.f32.mrb[0].mxu0
        %v729 = vadd.f32 %v603, %v728
        %v730 = vpop.f32.mrb[0].mxu0
        %v731 = vadd.f32 %v607, %v730
        %732 = vmatprep.mubr.f32.mxu0 %v275
        %733 = vmatmul.mubr.f32.gmra.mrb[0].mxu0 %v274
        %v734 = vpop.f32.mrb[0].mxu0
        %v735 = vadd.f32 %v603, %v734
        %v736 = vpop.f32.mrb[0].mxu0
        %v737 = vadd.f32 %v607, %v736
        %738 = vmatprep.mubr.f32.mxu0 %v279
        %739 = vmatmul.mubr.f32.gmra.mrb[0].mxu0 %v278
        %v740 = vpop.f32.mrb[0].mxu0
        %v741 = vadd.f32 %v603, %v740
        %v742 = vpop.f32.mrb[0].mxu0
        %v743 = vadd.f32 %v607, %v742
        %744 = vmatprep.mubr.f32.mxu0 %v283
        %745 = vmatmul.mubr.f32.gmra.mrb[0].mxu0 %v282
        %v746 = vpop.f32.mrb[0].mxu0
        %v747 = vadd.f32 %v603, %v746
        %v748 = vpop.f32.mrb[0].mxu0
        %v749 = vadd.f32 %v607, %v748
        %750 = vmatprep.mubr.f32.mxu0 %v287
        %751 = vmatmul.mubr.f32.gmra.mrb[0].mxu0 %v286
        %v752 = vpop.f32.mrb[0].mxu0
        %v753 = vadd.f32 %v603, %v752
        %v754 = vpop.f32.mrb[0].mxu0
        %v755 = vadd.f32 %v607, %v754
        %756 = vmatprep.mubr.f32.mxu0 %v291
        %757 = vmatmul.mubr.f32.gmra.mrb[0].mxu0 %v290
        %v758 = vpop.f32.mrb[0].mxu0
        %v759 = vadd.f32 %v603, %v758
        %v760 = vpop.f32.mrb[0].mxu0
        %v761 = vadd.f32 %v607, %v760
        %762 = vmatprep.mubr.f32.mxu0 %v295
        %763 = vmatmul.mubr.f32.gmra.mrb[0].mxu0 %v294
        %v764 = vpop.f32.mrb[0].mxu0
        %v765 = vadd.f32 %v603, %v764
        %v766 = vpop.f32.mrb[0].mxu0
        %v767 = vadd.f32 %v607, %v766
        %768 = vmatprep.mubr.f32.mxu0 %v299
        %769 = vmatmul.mubr.f32.gmra.mrb[0].mxu0 %v298
        %v770 = vpop.f32.mrb[0].mxu0
        %v771 = vadd.f32 %v603, %v770
        %v772 = vpop.f32.mrb[0].mxu0
        %v773 = vadd.f32 %v607, %v772
        %774 = vmatprep.mubr.f32.mxu0 %v303
        %775 = vmatmul.mubr.f32.gmra.mrb[0].mxu0 %v302
        %v776 = vpop.f32.mrb[0].mxu0
        %v777 = vadd.f32 %v603, %v776
        %v778 = vpop.f32.mrb[0].mxu0
        %v779 = vadd.f32 %v607, %v778
        %780 = vmatprep.mubr.f32.mxu0 %v307
        %781 = vmatmul.mubr.f32.gmra.mrb[0].mxu0 %v306
        %v782 = vpop.f32.mrb[0].mxu0
        %v783 = vadd.f32 %v603, %v782
        %v784 = vpop.f32.mrb[0].mxu0
        %v785 = vadd.f32 %v607, %v784
        %786 = vmatprep.mubr.f32.mxu0 %v311
        %787 = vmatmul.mubr.f32.gmra.mrb[0].mxu0 %v310
        %v788 = vpop.f32.mrb[0].mxu0
        %v789 = vadd.f32 %v603, %v788
        %v790 = vpop.f32.mrb[0].mxu0
        %v791 = vadd.f32 %v607, %v790
        %792 = vmatprep.mubr.f32.mxu0 %v315
        %793 = vmatmul.mubr.f32.gmra.mrb[0].mxu0 %v314
        %v794 = vpop.f32.mrb[0].mxu0
        %v795 = vadd.f32 %v603, %v794
        %v796 = vpop.f32.mrb[0].mxu0
        %v797 = vadd.f32 %v607, %v796
        %798 = vmatprep.mubr.f32.mxu0 %v319
        %799 = vmatmul.mubr.f32.gmra.mrb[0].mxu0 %v318
        %v800 = vpop.f32.mrb[0].mxu0
        %v801 = vadd.f32 %v603, %v800
        %v802 = vpop.f32.mrb[0].mxu0
        %v803 = vadd.f32 %v607, %v802
        %804 = vmatprep.mubr.f32.mxu0 %v323
        %805 = vmatmul.mubr.f32.gmra.mrb[0].mxu0 %v322
        %v806 = vpop.f32.mrb[0].mxu0
        %v807 = vadd.f32 %v603, %v806
        %v808 = vpop.f32.mrb[0].mxu0
        %v809 = vadd.f32 %v607, %v808
        %810 = vmatprep.mubr.f32.mxu0 %v327
        %811 = vmatmul.mubr.f32.gmra.mrb[0].mxu0 %v326
        %v812 = vpop.f32.mrb[0].mxu0
        %v813 = vadd.f32 %v603, %v812
        %v814 = vpop.f32.mrb[0].mxu0
        %v815 = vadd.f32 %v607, %v814
        %816 = vmatprep.mubr.f32.mxu0 %v331
        %817 = vmatmul.mubr.f32.gmra.mrb[0].mxu0 %v330
        %v818 = vpop.f32.mrb[0].mxu0
        %v819 = vadd.f32 %v603, %v818
        %v820 = vpop.f32.mrb[0].mxu0
        %v821 = vadd.f32 %v607, %v820
        %822 = vmatprep.mubr.f32.mxu0 %v335
        %823 = vmatmul.mubr.f32.gmra.mrb[0].mxu0 %v334
        %v824 = vpop.f32.mrb[0].mxu0
        %v825 = vadd.f32 %v603, %v824
        %v826 = vpop.f32.mrb[0].mxu0
        %v827 = vadd.f32 %v607, %v826
        %828 = vmatprep.mubr.f32.mxu0 %v339
        %829 = vmatmul.mubr.f32.gmra.mrb[0].mxu0 %v338
        %v830 = vpop.f32.mrb[0].mxu0
        %v831 = vadd.f32 %v603, %v830
        %v832 = vpop.f32.mrb[0].mxu0
        %v833 = vadd.f32 %v607, %v832
        %834 = vdwg.mxu0
        %835 = vmatprep.subr.mxu0 %v471
        %836 = vmatpush1.msra.mxu0 %v470
        %837 = vmatprep.subr.mxu0 %v475
        %838 = vmatpush1.msra.mxu0 %v474
        %839 = vmatprep.subr.mxu0 %v479
        %840 = vmatpush1.msra.mxu0 %v478
        %841 = vmatprep.subr.mxu0 %v483
        %842 = vmatpush1.msra.mxu0 %v482
        %843 = vmatprep.subr.mxu0 %v487
        %844 = vmatpush1.msra.mxu0 %v486
        %845 = vmatprep.subr.mxu0 %v491
        %846 = vmatpush1.msra.mxu0 %v490
        %847 = vmatprep.subr.mxu0 %v495
        %848 = vmatpush1.msra.mxu0 %v494
        %849 = vmatprep.subr.mxu0 %v499
        %850 = vmatpush1.msra.mxu0 %v498
        %851 = vmatprep.subr.mxu0 %v503
        %852 = vmatpush1.msra.mxu0 %v502
        %853 = vmatprep.subr.mxu0 %v507
        %854 = vmatpush1.msra.mxu0 %v506
        %855 = vmatprep.subr.mxu0 %v511
        %856 = vmatpush1.msra.mxu0 %v510
        %857 = vmatprep.subr.mxu0 %v515
        %858 = vmatpush1.msra.mxu0 %v514
        %859 = vmatprep.subr.mxu0 %v519
        %860 = vmatpush1.msra.mxu0 %v518
        %861 = vmatprep.subr.mxu0 %v523
        %862 = vmatpush1.msra.mxu0 %v522
        %863 = vmatprep.subr.mxu0 %v527
        %864 = vmatpush1.msra.mxu0 %v526
        %865 = vmatprep.subr.mxu0 %v531
        %866 = vmatpush1.msra.mxu0 %v530
        %867 = vmatprep.subr.mxu0 %v535
        %868 = vmatpush1.msra.mxu0 %v534
        %869 = vmatprep.subr.mxu0 %v539
        %870 = vmatpush1.msra.mxu0 %v538
        %871 = vmatprep.subr.mxu0 %v543
        %872 = vmatpush1.msra.mxu0 %v542
        %873 = vmatprep.subr.mxu0 %v547
        %874 = vmatpush1.msra.mxu0 %v546
        %875 = vmatprep.subr.mxu0 %v551
        %876 = vmatpush1.msra.mxu0 %v550
        %877 = vmatprep.subr.mxu0 %v555
        %878 = vmatpush1.msra.mxu0 %v554
        %879 = vmatprep.subr.mxu0 %v559
        %880 = vmatpush1.msra.mxu0 %v558
        %881 = vmatprep.subr.mxu0 %v563
        %882 = vmatpush1.msra.mxu0 %v562
        %883 = vmatprep.subr.mxu0 %v567
        %884 = vmatpush1.msra.mxu0 %v566
        %885 = vmatprep.subr.mxu0 %v571
        %886 = vmatpush1.msra.mxu0 %v570
        %887 = vmatprep.subr.mxu0 %v575
        %888 = vmatpush1.msra.mxu0 %v574
        %889 = vmatprep.subr.mxu0 %v579
        %890 = vmatpush1.msra.mxu0 %v578
        %891 = vmatprep.subr.mxu0 %v583
        %892 = vmatpush1.msra.mxu0 %v582
        %893 = vmatprep.subr.mxu0 %v587
        %894 = vmatpush1.msra.mxu0 %v586
        %895 = vmatprep.subr.mxu0 %v591
        %896 = vmatpush1.msra.mxu0 %v590
        %897 = vmatprep.subr.mxu0 %v595
        %898 = vmatpush1.msra.mxu0 %v594
        %899 = vmatprep.mubr.f32.mxu0 %v245
        %900 = vmatmul.mubr.f32.gmra.mrb[0].mxu0 %v244
        %v901 = vpop.f32.mrb[0].mxu0
        %v902 = vadd.f32 %v687, %v901
        %v903 = vpop.f32.mrb[0].mxu0
        %v904 = vadd.f32 %v689, %v903
        %905 = vmatprep.mubr.f32.mxu0 %v249
        %906 = vmatmul.mubr.f32.gmra.mrb[0].mxu0 %v248
        %v907 = vpop.f32.mrb[0].mxu0
        %v908 = vadd.f32 %v693, %v907
        %v909 = vpop.f32.mrb[0].mxu0
        %v910 = vadd.f32 %v695, %v909
        %911 = vmatprep.mubr.f32.mxu0 %v253
        %912 = vmatmul.mubr.f32.gmra.mrb[0].mxu0 %v252
        %v913 = vpop.f32.mrb[0].mxu0
        %v914 = vadd.f32 %v699, %v913
        %v915 = vpop.f32.mrb[0].mxu0
        %v916 = vadd.f32 %v701, %v915
        %917 = vmatprep.mubr.f32.mxu0 %v257
        %918 = vmatmul.mubr.f32.gmra.mrb[0].mxu0 %v256
        %v919 = vpop.f32.mrb[0].mxu0
        %v920 = vadd.f32 %v705, %v919
        %v921 = vpop.f32.mrb[0].mxu0
        %v922 = vadd.f32 %v707, %v921
        %923 = vmatprep.mubr.f32.mxu0 %v261
        %924 = vmatmul.mubr.f32.gmra.mrb[0].mxu0 %v260
        %v925 = vpop.f32.mrb[0].mxu0
        %v926 = vadd.f32 %v711, %v925
        %v927 = vpop.f32.mrb[0].mxu0
        %v928 = vadd.f32 %v713, %v927
        %929 = vmatprep.mubr.f32.mxu0 %v265
        %930 = vmatmul.mubr.f32.gmra.mrb[0].mxu0 %v264
        %v931 = vpop.f32.mrb[0].mxu0
        %v932 = vadd.f32 %v717, %v931
        %v933 = vpop.f32.mrb[0].mxu0
        %v934 = vadd.f32 %v719, %v933
        %935 = vmatprep.mubr.f32.mxu0 %v269
        %936 = vmatmul.mubr.f32.gmra.mrb[0].mxu0 %v268
        %v937 = vpop.f32.mrb[0].mxu0
        %v938 = vadd.f32 %v723, %v937
        %v939 = vpop.f32.mrb[0].mxu0
        %v940 = vadd.f32 %v725, %v939
        %941 = vmatprep.mubr.f32.mxu0 %v273
        %942 = vmatmul.mubr.f32.gmra.mrb[0].mxu0 %v272
        %v943 = vpop.f32.mrb[0].mxu0
        %v944 = vadd.f32 %v729, %v943
        %v945 = vpop.f32.mrb[0].mxu0
        %v946 = vadd.f32 %v731, %v945
        %947 = vmatprep.mubr.f32.mxu0 %v277
        %948 = vmatmul.mubr.f32.gmra.mrb[0].mxu0 %v276
        %v949 = vpop.f32.mrb[0].mxu0
        %v950 = vadd.f32 %v735, %v949
        %v951 = vpop.f32.mrb[0].mxu0
        %v952 = vadd.f32 %v737, %v951
        %953 = vmatprep.mubr.f32.mxu0 %v281
        %954 = vmatmul.mubr.f32.gmra.mrb[0].mxu0 %v280
        %v955 = vpop.f32.mrb[0].mxu0
        %v956 = vadd.f32 %v741, %v955
        %v957 = vpop.f32.mrb[0].mxu0
        %v958 = vadd.f32 %v743, %v957
        %959 = vmatprep.mubr.f32.mxu0 %v285
        %960 = vmatmul.mubr.f32.gmra.mrb[0].mxu0 %v284
        %v961 = vpop.f32.mrb[0].mxu0
        %v962 = vadd.f32 %v747, %v961
        %v963 = vpop.f32.mrb[0].mxu0
        %v964 = vadd.f32 %v749, %v963
        %965 = vmatprep.mubr.f32.mxu0 %v289
        %966 = vmatmul.mubr.f32.gmra.mrb[0].mxu0 %v288
        %v967 = vpop.f32.mrb[0].mxu0
        %v968 = vadd.f32 %v753, %v967
        %v969 = vpop.f32.mrb[0].mxu0
        %v970 = vadd.f32 %v755, %v969
        %971 = vmatprep.mubr.f32.mxu0 %v293
        %972 = vmatmul.mubr.f32.gmra.mrb[0].mxu0 %v292
        %v973 = vpop.f32.mrb[0].mxu0
        %v974 = vadd.f32 %v759, %v973
        %v975 = vpop.f32.mrb[0].mxu0
        %v976 = vadd.f32 %v761, %v975
        %977 = vmatprep.mubr.f32.mxu0 %v297
        %978 = vmatmul.mubr.f32.gmra.mrb[0].mxu0 %v296
        %v979 = vpop.f32.mrb[0].mxu0
        %v980 = vadd.f32 %v765, %v979
        %v981 = vpop.f32.mrb[0].mxu0
        %v982 = vadd.f32 %v767, %v981
        %983 = vmatprep.mubr.f32.mxu0 %v301
        %984 = vmatmul.mubr.f32.gmra.mrb[0].mxu0 %v300
        %v985 = vpop.f32.mrb[0].mxu0
        %v986 = vadd.f32 %v771, %v985
        %v987 = vpop.f32.mrb[0].mxu0
        %v988 = vadd.f32 %v773, %v987
        %989 = vmatprep.mubr.f32.mxu0 %v305
        %990 = vmatmul.mubr.f32.gmra.mrb[0].mxu0 %v304
        %v991 = vpop.f32.mrb[0].mxu0
        %v992 = vadd.f32 %v777, %v991
        %v993 = vpop.f32.mrb[0].mxu0
        %v994 = vadd.f32 %v779, %v993
        %995 = vmatprep.mubr.f32.mxu0 %v309
        %996 = vmatmul.mubr.f32.gmra.mrb[0].mxu0 %v308
        %v997 = vpop.f32.mrb[0].mxu0
        %v998 = vadd.f32 %v783, %v997
        %v999 = vpop.f32.mrb[0].mxu0
        %v1000 = vadd.f32 %v785, %v999
        %1001 = vmatprep.mubr.f32.mxu0 %v313
        %1002 = vmatmul.mubr.f32.gmra.mrb[0].mxu0 %v312
        %v1003 = vpop.f32.mrb[0].mxu0
        %v1004 = vadd.f32 %v789, %v1003
        %v1005 = vpop.f32.mrb[0].mxu0
        %v1006 = vadd.f32 %v791, %v1005
        %1007 = vmatprep.mubr.f32.mxu0 %v317
        %1008 = vmatmul.mubr.f32.gmra.mrb[0].mxu0 %v316
        %v1009 = vpop.f32.mrb[0].mxu0
        %v1010 = vadd.f32 %v795, %v1009
        %v1011 = vpop.f32.mrb[0].mxu0
        %v1012 = vadd.f32 %v797, %v1011
        %1013 = vmatprep.mubr.f32.mxu0 %v321
        %1014 = vmatmul.mubr.f32.gmra.mrb[0].mxu0 %v320
        %v1015 = vpop.f32.mrb[0].mxu0
        %v1016 = vadd.f32 %v801, %v1015
        %v1017 = vpop.f32.mrb[0].mxu0
        %v1018 = vadd.f32 %v803, %v1017
        %1019 = vmatprep.mubr.f32.mxu0 %v325
        %1020 = vmatmul.mubr.f32.gmra.mrb[0].mxu0 %v324
        %v1021 = vpop.f32.mrb[0].mxu0
        %v1022 = vadd.f32 %v807, %v1021
        %v1023 = vpop.f32.mrb[0].mxu0
        %v1024 = vadd.f32 %v809, %v1023
        %1025 = vmatprep.mubr.f32.mxu0 %v329
        %1026 = vmatmul.mubr.f32.gmra.mrb[0].mxu0 %v328
        %v1027 = vpop.f32.mrb[0].mxu0
        %v1028 = vadd.f32 %v813, %v1027
        %v1029 = vpop.f32.mrb[0].mxu0
        %v1030 = vadd.f32 %v815, %v1029
        %1031 = vmatprep.mubr.f32.mxu0 %v333
        %1032 = vmatmul.mubr.f32.gmra.mrb[0].mxu0 %v332
        %v1033 = vpop.f32.mrb[0].mxu0
        %v1034 = vadd.f32 %v819, %v1033
        %v1035 = vpop.f32.mrb[0].mxu0
        %v1036 = vadd.f32 %v821, %v1035
        %1037 = vmatprep.mubr.f32.mxu0 %v337
        %1038 = vmatmul.mubr.f32.gmra.mrb[0].mxu0 %v336
        %v1039 = vpop.f32.mrb[0].mxu0
        %v1040 = vadd.f32 %v825, %v1039
        %v1041 = vpop.f32.mrb[0].mxu0
        %v1042 = vadd.f32 %v827, %v1041
        %1043 = vmatprep.mubr.f32.mxu0 %v341
        %1044 = vmatmul.mubr.f32.gmra.mrb[0].mxu0 %v340
        %v1045 = vpop.f32.mrb[0].mxu0
        %v1046 = vadd.f32 %v831, %v1045
        %v1047 = vpop.f32.mrb[0].mxu0
        %v1048 = vadd.f32 %v833, %v1047
        %1049 = vdwg.mxu0
        %1050 = vmatprep.subr.mxu0 %v345
        %1051 = vmatpush1.msra.mxu0 %v344
        %1052 = vmatprep.subr.mxu0 %v349
        %1053 = vmatpush1.msra.mxu0 %v348
        %1054 = vmatprep.subr.mxu0 %v353
        %1055 = vmatpush1.msra.mxu0 %v352
        %1056 = vmatprep.subr.mxu0 %v357
        %1057 = vmatpush1.msra.mxu0 %v356
        %1058 = vmatprep.subr.mxu0 %v361
        %1059 = vmatpush1.msra.mxu0 %v360
        %1060 = vmatprep.subr.mxu0 %v365
        %1061 = vmatpush1.msra.mxu0 %v364
        %1062 = vmatprep.subr.mxu0 %v369
        %1063 = vmatpush1.msra.mxu0 %v368
        %1064 = vmatprep.subr.mxu0 %v373
        %1065 = vmatpush1.msra.mxu0 %v372
        %1066 = vmatprep.subr.mxu0 %v377
        %1067 = vmatpush1.msra.mxu0 %v376
        %1068 = vmatprep.subr.mxu0 %v381
        %1069 = vmatpush1.msra.mxu0 %v380
        %1070 = vmatprep.subr.mxu0 %v385
        %1071 = vmatpush1.msra.mxu0 %v384
        %1072 = vmatprep.subr.mxu0 %v389
        %1073 = vmatpush1.msra.mxu0 %v388
        %1074 = vmatprep.subr.mxu0 %v393
        %1075 = vmatpush1.msra.mxu0 %v392
        %1076 = vmatprep.subr.mxu0 %v397
        %1077 = vmatpush1.msra.mxu0 %v396
        %1078 = vmatprep.subr.mxu0 %v401
        %1079 = vmatpush1.msra.mxu0 %v400
        %1080 = vmatprep.subr.mxu0 %v405
        %1081 = vmatpush1.msra.mxu0 %v404
        %1082 = vmatprep.subr.mxu0 %v409
        %1083 = vmatpush1.msra.mxu0 %v408
        %1084 = vmatprep.subr.mxu0 %v413
        %1085 = vmatpush1.msra.mxu0 %v412
        %1086 = vmatprep.subr.mxu0 %v417
        %1087 = vmatpush1.msra.mxu0 %v416
        %1088 = vmatprep.subr.mxu0 %v421
        %1089 = vmatpush1.msra.mxu0 %v420
        %1090 = vmatprep.subr.mxu0 %v425
        %1091 = vmatpush1.msra.mxu0 %v424
        %1092 = vmatprep.subr.mxu0 %v429
        %1093 = vmatpush1.msra.mxu0 %v428
        %1094 = vmatprep.subr.mxu0 %v433
        %1095 = vmatpush1.msra.mxu0 %v432
        %1096 = vmatprep.subr.mxu0 %v437
        %1097 = vmatpush1.msra.mxu0 %v436
        %1098 = vmatprep.subr.mxu0 %v441
        %1099 = vmatpush1.msra.mxu0 %v440
        %1100 = vmatprep.subr.mxu0 %v445
        %1101 = vmatpush1.msra.mxu0 %v444
        %1102 = vmatprep.subr.mxu0 %v449
        %1103 = vmatpush1.msra.mxu0 %v448
        %1104 = vmatprep.subr.mxu0 %v453
        %1105 = vmatpush1.msra.mxu0 %v452
        %1106 = vmatprep.subr.mxu0 %v457
        %1107 = vmatpush1.msra.mxu0 %v456
        %1108 = vmatprep.subr.mxu0 %v461
        %1109 = vmatpush1.msra.mxu0 %v460
        %1110 = vmatprep.subr.mxu0 %v465
        %1111 = vmatpush1.msra.mxu0 %v464
        %1112 = vmatprep.subr.mxu0 %v469
        %1113 = vmatpush1.msra.mxu0 %v468
        %1114 = vmatprep.mubr.f32.mxu0 %v243
        %1115 = vmatmul.mubr.f32.gmra.mrb[0].mxu0 %v242
        %v1116 = vpop.f32.mrb[0].mxu0
        %v1117 = vadd.f32 %v611, %v1116
        %v1118 = vpop.f32.mrb[0].mxu0
        %v1119 = vadd.f32 %v615, %v1118
        %1120 = vmatprep.mubr.f32.mxu0 %v247
        %1121 = vmatmul.mubr.f32.gmra.mrb[0].mxu0 %v246
        %v1122 = vpop.f32.mrb[0].mxu0
        %v1123 = vadd.f32 %v611, %v1122
        %v1124 = vpop.f32.mrb[0].mxu0
        %v1125 = vadd.f32 %v615, %v1124
        %1126 = vmatprep.mubr.f32.mxu0 %v251
        %1127 = vmatmul.mubr.f32.gmra.mrb[0].mxu0 %v250
        %v1128 = vpop.f32.mrb[0].mxu0
        %v1129 = vadd.f32 %v611, %v1128
        %v1130 = vpop.f32.mrb[0].mxu0
        %v1131 = vadd.f32 %v615, %v1130
        %1132 = vmatprep.mubr.f32.mxu0 %v255
        %1133 = vmatmul.mubr.f32.gmra.mrb[0].mxu0 %v254
        %v1134 = vpop.f32.mrb[0].mxu0
        %v1135 = vadd.f32 %v611, %v1134
        %v1136 = vpop.f32.mrb[0].mxu0
        %v1137 = vadd.f32 %v615, %v1136
        %1138 = vmatprep.mubr.f32.mxu0 %v259
        %1139 = vmatmul.mubr.f32.gmra.mrb[0].mxu0 %v258
        %v1140 = vpop.f32.mrb[0].mxu0
        %v1141 = vadd.f32 %v611, %v1140
        %v1142 = vpop.f32.mrb[0].mxu0
        %v1143 = vadd.f32 %v615, %v1142
        %1144 = vmatprep.mubr.f32.mxu0 %v263
        %1145 = vmatmul.mubr.f32.gmra.mrb[0].mxu0 %v262
        %v1146 = vpop.f32.mrb[0].mxu0
        %v1147 = vadd.f32 %v611, %v1146
        %v1148 = vpop.f32.mrb[0].mxu0
        %v1149 = vadd.f32 %v615, %v1148
        %1150 = vmatprep.mubr.f32.mxu0 %v267
        %1151 = vmatmul.mubr.f32.gmra.mrb[0].mxu0 %v266
        %v1152 = vpop.f32.mrb[0].mxu0
        %v1153 = vadd.f32 %v611, %v1152
        %v1154 = vpop.f32.mrb[0].mxu0
        %v1155 = vadd.f32 %v615, %v1154
        %1156 = vmatprep.mubr.f32.mxu0 %v271
        %1157 = vmatmul.mubr.f32.gmra.mrb[0].mxu0 %v270
        %v1158 = vpop.f32.mrb[0].mxu0
        %v1159 = vadd.f32 %v611, %v1158
        %v1160 = vpop.f32.mrb[0].mxu0
        %v1161 = vadd.f32 %v615, %v1160
        %1162 = vmatprep.mubr.f32.mxu0 %v275
        %1163 = vmatmul.mubr.f32.gmra.mrb[0].mxu0 %v274
        %v1164 = vpop.f32.mrb[0].mxu0
        %v1165 = vadd.f32 %v611, %v1164
        %v1166 = vpop.f32.mrb[0].mxu0
        %v1167 = vadd.f32 %v615, %v1166
        %1168 = vmatprep.mubr.f32.mxu0 %v279
        %1169 = vmatmul.mubr.f32.gmra.mrb[0].mxu0 %v278
        %v1170 = vpop.f32.mrb[0].mxu0
        %v1171 = vadd.f32 %v611, %v1170
        %v1172 = vpop.f32.mrb[0].mxu0
        %v1173 = vadd.f32 %v615, %v1172
        %1174 = vmatprep.mubr.f32.mxu0 %v283
        %1175 = vmatmul.mubr.f32.gmra.mrb[0].mxu0 %v282
        %v1176 = vpop.f32.mrb[0].mxu0
        %v1177 = vadd.f32 %v611, %v1176
        %v1178 = vpop.f32.mrb[0].mxu0
        %v1179 = vadd.f32 %v615, %v1178
        %1180 = vmatprep.mubr.f32.mxu0 %v287
        %1181 = vmatmul.mubr.f32.gmra.mrb[0].mxu0 %v286
        %v1182 = vpop.f32.mrb[0].mxu0
        %v1183 = vadd.f32 %v611, %v1182
        %v1184 = vpop.f32.mrb[0].mxu0
        %v1185 = vadd.f32 %v615, %v1184
        %1186 = vmatprep.mubr.f32.mxu0 %v291
        %1187 = vmatmul.mubr.f32.gmra.mrb[0].mxu0 %v290
        %v1188 = vpop.f32.mrb[0].mxu0
        %v1189 = vadd.f32 %v611, %v1188
        %v1190 = vpop.f32.mrb[0].mxu0
        %v1191 = vadd.f32 %v615, %v1190
        %1192 = vmatprep.mubr.f32.mxu0 %v295
        %1193 = vmatmul.mubr.f32.gmra.mrb[0].mxu0 %v294
        %v1194 = vpop.f32.mrb[0].mxu0
        %v1195 = vadd.f32 %v611, %v1194
        %v1196 = vpop.f32.mrb[0].mxu0
        %v1197 = vadd.f32 %v615, %v1196
        %1198 = vmatprep.mubr.f32.mxu0 %v299
        %1199 = vmatmul.mubr.f32.gmra.mrb[0].mxu0 %v298
        %v1200 = vpop.f32.mrb[0].mxu0
        %v1201 = vadd.f32 %v611, %v1200
        %v1202 = vpop.f32.mrb[0].mxu0
        %v1203 = vadd.f32 %v615, %v1202
        %1204 = vmatprep.mubr.f32.mxu0 %v303
        %1205 = vmatmul.mubr.f32.gmra.mrb[0].mxu0 %v302
        %v1206 = vpop.f32.mrb[0].mxu0
        %v1207 = vadd.f32 %v611, %v1206
        %v1208 = vpop.f32.mrb[0].mxu0
        %v1209 = vadd.f32 %v615, %v1208
        %1210 = vmatprep.mubr.f32.mxu0 %v307
        %1211 = vmatmul.mubr.f32.gmra.mrb[0].mxu0 %v306
        %v1212 = vpop.f32.mrb[0].mxu0
        %v1213 = vadd.f32 %v611, %v1212
        %v1214 = vpop.f32.mrb[0].mxu0
        %v1215 = vadd.f32 %v615, %v1214
        %1216 = vmatprep.mubr.f32.mxu0 %v311
        %1217 = vmatmul.mubr.f32.gmra.mrb[0].mxu0 %v310
        %v1218 = vpop.f32.mrb[0].mxu0
        %v1219 = vadd.f32 %v611, %v1218
        %v1220 = vpop.f32.mrb[0].mxu0
        %v1221 = vadd.f32 %v615, %v1220
        %1222 = vmatprep.mubr.f32.mxu0 %v315
        %1223 = vmatmul.mubr.f32.gmra.mrb[0].mxu0 %v314
        %v1224 = vpop.f32.mrb[0].mxu0
        %v1225 = vadd.f32 %v611, %v1224
        %v1226 = vpop.f32.mrb[0].mxu0
        %v1227 = vadd.f32 %v615, %v1226
        %1228 = vmatprep.mubr.f32.mxu0 %v319
        %1229 = vmatmul.mubr.f32.gmra.mrb[0].mxu0 %v318
        %v1230 = vpop.f32.mrb[0].mxu0
        %v1231 = vadd.f32 %v611, %v1230
        %v1232 = vpop.f32.mrb[0].mxu0
        %v1233 = vadd.f32 %v615, %v1232
        %1234 = vmatprep.mubr.f32.mxu0 %v323
        %1235 = vmatmul.mubr.f32.gmra.mrb[0].mxu0 %v322
        %v1236 = vpop.f32.mrb[0].mxu0
        %v1237 = vadd.f32 %v611, %v1236
        %v1238 = vpop.f32.mrb[0].mxu0
        %v1239 = vadd.f32 %v615, %v1238
        %1240 = vmatprep.mubr.f32.mxu0 %v327
        %1241 = vmatmul.mubr.f32.gmra.mrb[0].mxu0 %v326
        %v1242 = vpop.f32.mrb[0].mxu0
        %v1243 = vadd.f32 %v611, %v1242
        %v1244 = vpop.f32.mrb[0].mxu0
        %v1245 = vadd.f32 %v615, %v1244
        %1246 = vmatprep.mubr.f32.mxu0 %v331
        %1247 = vmatmul.mubr.f32.gmra.mrb[0].mxu0 %v330
        %v1248 = vpop.f32.mrb[0].mxu0
        %v1249 = vadd.f32 %v611, %v1248
        %v1250 = vpop.f32.mrb[0].mxu0
        %v1251 = vadd.f32 %v615, %v1250
        %1252 = vmatprep.mubr.f32.mxu0 %v335
        %1253 = vmatmul.mubr.f32.gmra.mrb[0].mxu0 %v334
        %v1254 = vpop.f32.mrb[0].mxu0
        %v1255 = vadd.f32 %v611, %v1254
        %v1256 = vpop.f32.mrb[0].mxu0
        %v1257 = vadd.f32 %v615, %v1256
        %1258 = vmatprep.mubr.f32.mxu0 %v339
        %1259 = vmatmul.mubr.f32.gmra.mrb[0].mxu0 %v338
        %v1260 = vpop.f32.mrb[0].mxu0
        %v1261 = vadd.f32 %v611, %v1260
        %v1262 = vpop.f32.mrb[0].mxu0
        %v1263 = vadd.f32 %v615, %v1262
        %1264 = vdwg.mxu0
        %1265 = vmatprep.subr.mxu0 %v473
        %1266 = vmatpush1.msra.mxu0 %v472
        %1267 = vmatprep.subr.mxu0 %v477
        %1268 = vmatpush1.msra.mxu0 %v476
        %1269 = vmatprep.subr.mxu0 %v481
        %1270 = vmatpush1.msra.mxu0 %v480
        %1271 = vmatprep.subr.mxu0 %v485
        %1272 = vmatpush1.msra.mxu0 %v484
        %1273 = vmatprep.subr.mxu0 %v489
        %1274 = vmatpush1.msra.mxu0 %v488
        %1275 = vmatprep.subr.mxu0 %v493
        %1276 = vmatpush1.msra.mxu0 %v492
        %1277 = vmatprep.subr.mxu0 %v497
        %1278 = vmatpush1.msra.mxu0 %v496
        %1279 = vmatprep.subr.mxu0 %v501
        %1280 = vmatpush1.msra.mxu0 %v500
        %1281 = vmatprep.subr.mxu0 %v505
        %1282 = vmatpush1.msra.mxu0 %v504
        %1283 = vmatprep.subr.mxu0 %v509
        %1284 = vmatpush1.msra.mxu0 %v508
        %1285 = vmatprep.subr.mxu0 %v513
        %1286 = vmatpush1.msra.mxu0 %v512
        %1287 = vmatprep.subr.mxu0 %v517
        %1288 = vmatpush1.msra.mxu0 %v516
        %1289 = vmatprep.subr.mxu0 %v521
        %1290 = vmatpush1.msra.mxu0 %v520
        %1291 = vmatprep.subr.mxu0 %v525
        %1292 = vmatpush1.msra.mxu0 %v524
        %1293 = vmatprep.subr.mxu0 %v529
        %1294 = vmatpush1.msra.mxu0 %v528
        %1295 = vmatprep.subr.mxu0 %v533
        %1296 = vmatpush1.msra.mxu0 %v532
        %1297 = vmatprep.subr.mxu0 %v537
        %1298 = vmatpush1.msra.mxu0 %v536
        %1299 = vmatprep.subr.mxu0 %v541
        %1300 = vmatpush1.msra.mxu0 %v540
        %1301 = vmatprep.subr.mxu0 %v545
        %1302 = vmatpush1.msra.mxu0 %v544
        %1303 = vmatprep.subr.mxu0 %v549
        %1304 = vmatpush1.msra.mxu0 %v548
        %1305 = vmatprep.subr.mxu0 %v553
        %1306 = vmatpush1.msra.mxu0 %v552
        %1307 = vmatprep.subr.mxu0 %v557
        %1308 = vmatpush1.msra.mxu0 %v556
        %1309 = vmatprep.subr.mxu0 %v561
        %1310 = vmatpush1.msra.mxu0 %v560
        %1311 = vmatprep.subr.mxu0 %v565
        %1312 = vmatpush1.msra.mxu0 %v564
        %1313 = vmatprep.subr.mxu0 %v569
        %1314 = vmatpush1.msra.mxu0 %v568
        %1315 = vmatprep.subr.mxu0 %v573
        %1316 = vmatpush1.msra.mxu0 %v572
        %1317 = vmatprep.subr.mxu0 %v577
        %1318 = vmatpush1.msra.mxu0 %v576
        %1319 = vmatprep.subr.mxu0 %v581
        %1320 = vmatpush1.msra.mxu0 %v580
        %1321 = vmatprep.subr.mxu0 %v585
        %1322 = vmatpush1.msra.mxu0 %v584
        %1323 = vmatprep.subr.mxu0 %v589
        %1324 = vmatpush1.msra.mxu0 %v588
        %1325 = vmatprep.subr.mxu0 %v593
        %1326 = vmatpush1.msra.mxu0 %v592
        %1327 = vmatprep.subr.mxu0 %v597
        %1328 = vmatpush1.msra.mxu0 %v596
        %1329 = vmatprep.mubr.f32.mxu0 %v245
        %1330 = vmatmul.mubr.f32.gmra.mrb[0].mxu0 %v244
        %v1331 = vpop.f32.mrb[0].mxu0
        %v1332 = vadd.f32 %v1117, %v1331
        %v1333 = vpop.f32.mrb[0].mxu0
        %v1334 = vadd.f32 %v1119, %v1333
        %1335 = vmatprep.mubr.f32.mxu0 %v249
        %1336 = vmatmul.mubr.f32.gmra.mrb[0].mxu0 %v248
        %v1337 = vpop.f32.mrb[0].mxu0
        %v1338 = vadd.f32 %v1123, %v1337
        %v1339 = vpop.f32.mrb[0].mxu0
        %v1340 = vadd.f32 %v1125, %v1339
        %1341 = vmatprep.mubr.f32.mxu0 %v253
        %1342 = vmatmul.mubr.f32.gmra.mrb[0].mxu0 %v252
        %v1343 = vpop.f32.mrb[0].mxu0
        %v1344 = vadd.f32 %v1129, %v1343
        %v1345 = vpop.f32.mrb[0].mxu0
        %v1346 = vadd.f32 %v1131, %v1345
        %1347 = vmatprep.mubr.f32.mxu0 %v257
        %1348 = vmatmul.mubr.f32.gmra.mrb[0].mxu0 %v256
        %v1349 = vpop.f32.mrb[0].mxu0
        %v1350 = vadd.f32 %v1135, %v1349
        %v1351 = vpop.f32.mrb[0].mxu0
        %v1352 = vadd.f32 %v1137, %v1351
        %1353 = vmatprep.mubr.f32.mxu0 %v261
        %1354 = vmatmul.mubr.f32.gmra.mrb[0].mxu0 %v260
        %v1355 = vpop.f32.mrb[0].mxu0
        %v1356 = vadd.f32 %v1141, %v1355
        %v1357 = vpop.f32.mrb[0].mxu0
        %v1358 = vadd.f32 %v1143, %v1357
        %1359 = vmatprep.mubr.f32.mxu0 %v265
        %1360 = vmatmul.mubr.f32.gmra.mrb[0].mxu0 %v264
        %v1361 = vpop.f32.mrb[0].mxu0
        %v1362 = vadd.f32 %v1147, %v1361
        %v1363 = vpop.f32.mrb[0].mxu0
        %v1364 = vadd.f32 %v1149, %v1363
        %1365 = vmatprep.mubr.f32.mxu0 %v269
        %1366 = vmatmul.mubr.f32.gmra.mrb[0].mxu0 %v268
        %v1367 = vpop.f32.mrb[0].mxu0
        %v1368 = vadd.f32 %v1153, %v1367
        %v1369 = vpop.f32.mrb[0].mxu0
        %v1370 = vadd.f32 %v1155, %v1369
        %1371 = vmatprep.mubr.f32.mxu0 %v273
        %1372 = vmatmul.mubr.f32.gmra.mrb[0].mxu0 %v272
        %v1373 = vpop.f32.mrb[0].mxu0
        %v1374 = vadd.f32 %v1159, %v1373
        %v1375 = vpop.f32.mrb[0].mxu0
        %v1376 = vadd.f32 %v1161, %v1375
        %1377 = vmatprep.mubr.f32.mxu0 %v277
        %1378 = vmatmul.mubr.f32.gmra.mrb[0].mxu0 %v276
        %v1379 = vpop.f32.mrb[0].mxu0
        %v1380 = vadd.f32 %v1165, %v1379
        %v1381 = vpop.f32.mrb[0].mxu0
        %v1382 = vadd.f32 %v1167, %v1381
        %1383 = vmatprep.mubr.f32.mxu0 %v281
        %1384 = vmatmul.mubr.f32.gmra.mrb[0].mxu0 %v280
        %v1385 = vpop.f32.mrb[0].mxu0
        %v1386 = vadd.f32 %v1171, %v1385
        %v1387 = vpop.f32.mrb[0].mxu0
        %v1388 = vadd.f32 %v1173, %v1387
        %1389 = vmatprep.mubr.f32.mxu0 %v285
        %1390 = vmatmul.mubr.f32.gmra.mrb[0].mxu0 %v284
        %v1391 = vpop.f32.mrb[0].mxu0
        %v1392 = vadd.f32 %v1177, %v1391
        %v1393 = vpop.f32.mrb[0].mxu0
        %v1394 = vadd.f32 %v1179, %v1393
        %1395 = vmatprep.mubr.f32.mxu0 %v289
        %1396 = vmatmul.mubr.f32.gmra.mrb[0].mxu0 %v288
        %v1397 = vpop.f32.mrb[0].mxu0
        %v1398 = vadd.f32 %v1183, %v1397
        %v1399 = vpop.f32.mrb[0].mxu0
        %v1400 = vadd.f32 %v1185, %v1399
        %1401 = vmatprep.mubr.f32.mxu0 %v293
        %1402 = vmatmul.mubr.f32.gmra.mrb[0].mxu0 %v292
        %v1403 = vpop.f32.mrb[0].mxu0
        %v1404 = vadd.f32 %v1189, %v1403
        %v1405 = vpop.f32.mrb[0].mxu0
        %v1406 = vadd.f32 %v1191, %v1405
        %1407 = vmatprep.mubr.f32.mxu0 %v297
        %1408 = vmatmul.mubr.f32.gmra.mrb[0].mxu0 %v296
        %v1409 = vpop.f32.mrb[0].mxu0
        %v1410 = vadd.f32 %v1195, %v1409
        %v1411 = vpop.f32.mrb[0].mxu0
        %v1412 = vadd.f32 %v1197, %v1411
        %1413 = vmatprep.mubr.f32.mxu0 %v301
        %1414 = vmatmul.mubr.f32.gmra.mrb[0].mxu0 %v300
        %v1415 = vpop.f32.mrb[0].mxu0
        %v1416 = vadd.f32 %v1201, %v1415
        %v1417 = vpop.f32.mrb[0].mxu0
        %v1418 = vadd.f32 %v1203, %v1417
        %1419 = vmatprep.mubr.f32.mxu0 %v305
        %1420 = vmatmul.mubr.f32.gmra.mrb[0].mxu0 %v304
        %v1421 = vpop.f32.mrb[0].mxu0
        %v1422 = vadd.f32 %v1207, %v1421
        %v1423 = vpop.f32.mrb[0].mxu0
        %v1424 = vadd.f32 %v1209, %v1423
        %1425 = vmatprep.mubr.f32.mxu0 %v309
        %1426 = vmatmul.mubr.f32.gmra.mrb[0].mxu0 %v308
        %v1427 = vpop.f32.mrb[0].mxu0
        %v1428 = vadd.f32 %v1213, %v1427
        %v1429 = vpop.f32.mrb[0].mxu0
        %v1430 = vadd.f32 %v1215, %v1429
        %1431 = vmatprep.mubr.f32.mxu0 %v313
        %1432 = vmatmul.mubr.f32.gmra.mrb[0].mxu0 %v312
        %v1433 = vpop.f32.mrb[0].mxu0
        %v1434 = vadd.f32 %v1219, %v1433
        %v1435 = vpop.f32.mrb[0].mxu0
        %v1436 = vadd.f32 %v1221, %v1435
        %1437 = vmatprep.mubr.f32.mxu0 %v317
        %1438 = vmatmul.mubr.f32.gmra.mrb[0].mxu0 %v316
        %v1439 = vpop.f32.mrb[0].mxu0
        %v1440 = vadd.f32 %v1225, %v1439
        %v1441 = vpop.f32.mrb[0].mxu0
        %v1442 = vadd.f32 %v1227, %v1441
        %1443 = vmatprep.mubr.f32.mxu0 %v321
        %1444 = vmatmul.mubr.f32.gmra.mrb[0].mxu0 %v320
        %v1445 = vpop.f32.mrb[0].mxu0
        %v1446 = vadd.f32 %v1231, %v1445
        %v1447 = vpop.f32.mrb[0].mxu0
        %v1448 = vadd.f32 %v1233, %v1447
        %1449 = vmatprep.mubr.f32.mxu0 %v325
        %1450 = vmatmul.mubr.f32.gmra.mrb[0].mxu0 %v324
        %v1451 = vpop.f32.mrb[0].mxu0
        %v1452 = vadd.f32 %v1237, %v1451
        %v1453 = vpop.f32.mrb[0].mxu0
        %v1454 = vadd.f32 %v1239, %v1453
        %1455 = vmatprep.mubr.f32.mxu0 %v329
        %1456 = vmatmul.mubr.f32.gmra.mrb[0].mxu0 %v328
        %v1457 = vpop.f32.mrb[0].mxu0
        %v1458 = vadd.f32 %v1243, %v1457
        %v1459 = vpop.f32.mrb[0].mxu0
        %v1460 = vadd.f32 %v1245, %v1459
        %1461 = vmatprep.mubr.f32.mxu0 %v333
        %1462 = vmatmul.mubr.f32.gmra.mrb[0].mxu0 %v332
        %v1463 = vpop.f32.mrb[0].mxu0
        %v1464 = vadd.f32 %v1249, %v1463
        %v1465 = vpop.f32.mrb[0].mxu0
        %v1466 = vadd.f32 %v1251, %v1465
        %1467 = vmatprep.mubr.f32.mxu0 %v337
        %1468 = vmatmul.mubr.f32.gmra.mrb[0].mxu0 %v336
        %v1469 = vpop.f32.mrb[0].mxu0
        %v1470 = vadd.f32 %v1255, %v1469
        %v1471 = vpop.f32.mrb[0].mxu0
        %v1472 = vadd.f32 %v1257, %v1471
        %1473 = vmatprep.mubr.f32.mxu0 %v341
        %1474 = vmatmul.mubr.f32.gmra.mrb[0].mxu0 %v340
        %v1475 = vpop.f32.mrb[0].mxu0
        %v1476 = vadd.f32 %v1261, %v1475
        %v1477 = vpop.f32.mrb[0].mxu0
        %v1478 = vadd.f32 %v1263, %v1477
        %1479 = vdwg.mxu0
        %v1480 = vmul.f32 %v902, 0.70710677
        %v1481 = vmul.f32 %v904, 0.70710677
        %v1482 = vmul.f32 %v1332, 0.70710677
        %v1483 = vmul.f32 %v1334, 0.70710677
        %v1484 = vmul.f32 %v908, 0.70710677
        %v1485 = vmul.f32 %v910, 0.70710677
        %v1486 = vmul.f32 %v1338, 0.70710677
        %v1487 = vmul.f32 %v1340, 0.70710677
        %v1488 = vmul.f32 %v914, 0.70710677
        %v1489 = vmul.f32 %v916, 0.70710677
        %v1490 = vmul.f32 %v1344, 0.70710677
        %v1491 = vmul.f32 %v1346, 0.70710677
        %v1492 = vmul.f32 %v920, 0.70710677
        %v1493 = vmul.f32 %v922, 0.70710677
        %v1494 = vmul.f32 %v1350, 0.70710677
        %v1495 = vmul.f32 %v1352, 0.70710677
        %v1496 = vmul.f32 %v926, 0.70710677
        %v1497 = vmul.f32 %v928, 0.70710677
        %v1498 = vmul.f32 %v1356, 0.70710677
        %v1499 = vmul.f32 %v1358, 0.70710677
        %v1500 = vmul.f32 %v932, 0.70710677
        %v1501 = vmul.f32 %v934, 0.70710677
        %v1502 = vmul.f32 %v1362, 0.70710677
        %v1503 = vmul.f32 %v1364, 0.70710677
        %v1504 = vmul.f32 %v938, 0.70710677
        %v1505 = vmul.f32 %v940, 0.70710677
        %v1506 = vmul.f32 %v1368, 0.70710677
        %v1507 = vmul.f32 %v1370, 0.70710677
        %v1508 = vmul.f32 %v944, 0.70710677
        %v1509 = vmul.f32 %v946, 0.70710677
        %v1510 = vmul.f32 %v1374, 0.70710677
        %v1511 = vmul.f32 %v1376, 0.70710677
        %v1512 = vmul.f32 %v950, 0.70710677
        %v1513 = vmul.f32 %v952, 0.70710677
        %v1514 = vmul.f32 %v1380, 0.70710677
        %v1515 = vmul.f32 %v1382, 0.70710677
        %v1516 = vmul.f32 %v956, 0.70710677
        %v1517 = vmul.f32 %v958, 0.70710677
        %v1518 = vmul.f32 %v1386, 0.70710677
        %v1519 = vmul.f32 %v1388, 0.70710677
        %v1520 = vmul.f32 %v962, 0.70710677
        %v1521 = vmul.f32 %v964, 0.70710677
        %v1522 = vmul.f32 %v1392, 0.70710677
        %v1523 = vmul.f32 %v1394, 0.70710677
        %v1524 = vmul.f32 %v968, 0.70710677
        %v1525 = vmul.f32 %v970, 0.70710677
        %v1526 = vmul.f32 %v1398, 0.70710677
        %v1527 = vmul.f32 %v1400, 0.70710677
        %v1528 = vmul.f32 %v974, 0.70710677
        %v1529 = vmul.f32 %v976, 0.70710677
        %v1530 = vmul.f32 %v1404, 0.70710677
        %v1531 = vmul.f32 %v1406, 0.70710677
        %v1532 = vmul.f32 %v980, 0.70710677
        %v1533 = vmul.f32 %v982, 0.70710677
        %v1534 = vmul.f32 %v1410, 0.70710677
        %v1535 = vmul.f32 %v1412, 0.70710677
        %v1536 = vmul.f32 %v986, 0.70710677
        %v1537 = vmul.f32 %v988, 0.70710677
        %v1538 = vmul.f32 %v1416, 0.70710677
        %v1539 = vmul.f32 %v1418, 0.70710677
        %v1540 = vmul.f32 %v992, 0.70710677
        %v1541 = vmul.f32 %v994, 0.70710677
        %v1542 = vmul.f32 %v1422, 0.70710677
        %v1543 = vmul.f32 %v1424, 0.70710677
        %v1544 = vmul.f32 %v998, 0.70710677
        %v1545 = vmul.f32 %v1000, 0.70710677
        %v1546 = vmul.f32 %v1428, 0.70710677
        %v1547 = vmul.f32 %v1430, 0.70710677
        %v1548 = vmul.f32 %v1004, 0.70710677
        %v1549 = vmul.f32 %v1006, 0.70710677
        %v1550 = vmul.f32 %v1434, 0.70710677
        %v1551 = vmul.f32 %v1436, 0.70710677
        %v1552 = vmul.f32 %v1010, 0.70710677
        %v1553 = vmul.f32 %v1012, 0.70710677
        %v1554 = vmul.f32 %v1440, 0.70710677
        %v1555 = vmul.f32 %v1442, 0.70710677
        %v1556 = vmul.f32 %v1016, 0.70710677
        %v1557 = vmul.f32 %v1018, 0.70710677
        %v1558 = vmul.f32 %v1446, 0.70710677
        %v1559 = vmul.f32 %v1448, 0.70710677
        %v1560 = vmul.f32 %v1022, 0.70710677
        %v1561 = vmul.f32 %v1024, 0.70710677
        %v1562 = vmul.f32 %v1452, 0.70710677
        %v1563 = vmul.f32 %v1454, 0.70710677
        %v1564 = vmul.f32 %v1028, 0.70710677
        %v1565 = vmul.f32 %v1030, 0.70710677
        %v1566 = vmul.f32 %v1458, 0.70710677
        %v1567 = vmul.f32 %v1460, 0.70710677
        %v1568 = vmul.f32 %v1034, 0.70710677
        %v1569 = vmul.f32 %v1036, 0.70710677
        %v1570 = vmul.f32 %v1464, 0.70710677
        %v1571 = vmul.f32 %v1466, 0.70710677
        %v1572 = vmul.f32 %v1040, 0.70710677
        %v1573 = vmul.f32 %v1042, 0.70710677
        %v1574 = vmul.f32 %v1470, 0.70710677
        %v1575 = vmul.f32 %v1472, 0.70710677
        %v1576 = vmul.f32 %v1046, 0.70710677
        %v1577 = vmul.f32 %v1048, 0.70710677
        %v1578 = vmul.f32 %v1476, 0.70710677
        %v1579 = vmul.f32 %v1478, 0.70710677
        %v1580 = verf.f32.pop %v1480
        %v1581 = verf.f32.pop %v1481
        %v1582 = verf.f32.pop %v1482
        %v1583 = verf.f32.pop %v1483
        %v1584 = verf.f32.pop %v1484
        %v1585 = verf.f32.pop %v1485
        %v1586 = verf.f32.pop %v1486
        %v1587 = verf.f32.pop %v1487
        %v1588 = verf.f32.pop %v1488
        %v1589 = verf.f32.pop %v1489
        %v1590 = verf.f32.pop %v1490
        %v1591 = verf.f32.pop %v1491
        %v1592 = verf.f32.pop %v1492
        %v1593 = verf.f32.pop %v1493
        %v1594 = verf.f32.pop %v1494
        %v1595 = verf.f32.pop %v1495
        %v1596 = verf.f32.pop %v1496
        %v1597 = verf.f32.pop %v1497
        %v1598 = verf.f32.pop %v1498
        %v1599 = verf.f32.pop %v1499
        %v1600 = verf.f32.pop %v1500
        %v1601 = verf.f32.pop %v1501
        %v1602 = verf.f32.pop %v1502
        %v1603 = verf.f32.pop %v1503
        %v1604 = verf.f32.pop %v1504
        %v1605 = verf.f32.pop %v1505
        %v1606 = verf.f32.pop %v1506
        %v1607 = verf.f32.pop %v1507
        %v1608 = verf.f32.pop %v1508
        %v1609 = verf.f32.pop %v1509
        %v1610 = verf.f32.pop %v1510
        %v1611 = verf.f32.pop %v1511
        %v1612 = verf.f32.pop %v1512
        %v1613 = verf.f32.pop %v1513
        %v1614 = verf.f32.pop %v1514
        %v1615 = verf.f32.pop %v1515
        %v1616 = verf.f32.pop %v1516
        %v1617 = verf.f32.pop %v1517
        %v1618 = verf.f32.pop %v1518
        %v1619 = verf.f32.pop %v1519
        %v1620 = verf.f32.pop %v1520
        %v1621 = verf.f32.pop %v1521
        %v1622 = verf.f32.pop %v1522
        %v1623 = verf.f32.pop %v1523
        %v1624 = verf.f32.pop %v1524
        %v1625 = verf.f32.pop %v1525
        %v1626 = verf.f32.pop %v1526
        %v1627 = verf.f32.pop %v1527
        %v1628 = verf.f32.pop %v1528
        %v1629 = verf.f32.pop %v1529
        %v1630 = verf.f32.pop %v1530
        %v1631 = verf.f32.pop %v1531
        %v1632 = verf.f32.pop %v1532
        %v1633 = verf.f32.pop %v1533
        %v1634 = verf.f32.pop %v1534
        %v1635 = verf.f32.pop %v1535
        %v1636 = verf.f32.pop %v1536
        %v1637 = verf.f32.pop %v1537
        %v1638 = verf.f32.pop %v1538
        %v1639 = verf.f32.pop %v1539
        %v1640 = verf.f32.pop %v1540
        %v1641 = verf.f32.pop %v1541
        %v1642 = verf.f32.pop %v1542
        %v1643 = verf.f32.pop %v1543
        %v1644 = verf.f32.pop %v1544
        %v1645 = verf.f32.pop %v1545
        %v1646 = verf.f32.pop %v1546
        %v1647 = verf.f32.pop %v1547
        %v1648 = verf.f32.pop %v1548
        %v1649 = verf.f32.pop %v1549
        %v1650 = verf.f32.pop %v1550
        %v1651 = verf.f32.pop %v1551
        %v1652 = verf.f32.pop %v1552
        %v1653 = verf.f32.pop %v1553
        %v1654 = verf.f32.pop %v1554
        %v1655 = verf.f32.pop %v1555
        %v1656 = verf.f32.pop %v1556
        %v1657 = verf.f32.pop %v1557
        %v1658 = verf.f32.pop %v1558
        %v1659 = verf.f32.pop %v1559
        %v1660 = verf.f32.pop %v1560
        %v1661 = verf.f32.pop %v1561
        %v1662 = verf.f32.pop %v1562
        %v1663 = verf.f32.pop %v1563
        %v1664 = verf.f32.pop %v1564
        %v1665 = verf.f32.pop %v1565
        %v1666 = verf.f32.pop %v1566
        %v1667 = verf.f32.pop %v1567
        %v1668 = verf.f32.pop %v1568
        %v1669 = verf.f32.pop %v1569
        %v1670 = verf.f32.pop %v1570
        %v1671 = verf.f32.pop %v1571
        %v1672 = verf.f32.pop %v1572
        %v1673 = verf.f32.pop %v1573
        %v1674 = verf.f32.pop %v1574
        %v1675 = verf.f32.pop %v1575
        %v1676 = verf.f32.pop %v1576
        %v1677 = verf.f32.pop %v1577
        %v1678 = verf.f32.pop %v1578
        %v1679 = verf.f32.pop %v1579
        %v1680 = vmul.f32 %v1580, 0.5
        %v1681 = vmul.f32 %v1581, 0.5
        %v1682 = vmul.f32 %v1582, 0.5
        %v1683 = vmul.f32 %v1583, 0.5
        %v1684 = vmul.f32 %v1584, 0.5
        %v1685 = vmul.f32 %v1585, 0.5
        %v1686 = vmul.f32 %v1586, 0.5
        %v1687 = vmul.f32 %v1587, 0.5
        %v1688 = vmul.f32 %v1588, 0.5
        %v1689 = vmul.f32 %v1589, 0.5
        %v1690 = vmul.f32 %v1590, 0.5
        %v1691 = vmul.f32 %v1591, 0.5
        %v1692 = vmul.f32 %v1592, 0.5
        %v1693 = vmul.f32 %v1593, 0.5
        %v1694 = vmul.f32 %v1594, 0.5
        %v1695 = vmul.f32 %v1595, 0.5
        %v1696 = vmul.f32 %v1596, 0.5
        %v1697 = vmul.f32 %v1597, 0.5
        %v1698 = vmul.f32 %v1598, 0.5
        %v1699 = vmul.f32 %v1599, 0.5
        %v1700 = vmul.f32 %v1600, 0.5
        %v1701 = vmul.f32 %v1601, 0.5
        %v1702 = vmul.f32 %v1602, 0.5
        %v1703 = vmul.f32 %v1603, 0.5
        %v1704 = vmul.f32 %v1604, 0.5
        %v1705 = vmul.f32 %v1605, 0.5
        %v1706 = vmul.f32 %v1606, 0.5
        %v1707 = vmul.f32 %v1607, 0.5
        %v1708 = vmul.f32 %v1608, 0.5
        %v1709 = vmul.f32 %v1609, 0.5
        %v1710 = vmul.f32 %v1610, 0.5
        %v1711 = vmul.f32 %v1611, 0.5
        %v1712 = vmul.f32 %v1612, 0.5
        %v1713 = vmul.f32 %v1613, 0.5
        %v1714 = vmul.f32 %v1614, 0.5
        %v1715 = vmul.f32 %v1615, 0.5
        %v1716 = vmul.f32 %v1616, 0.5
        %v1717 = vmul.f32 %v1617, 0.5
        %v1718 = vmul.f32 %v1618, 0.5
        %v1719 = vmul.f32 %v1619, 0.5
        %v1720 = vmul.f32 %v1620, 0.5
        %v1721 = vmul.f32 %v1621, 0.5
        %v1722 = vmul.f32 %v1622, 0.5
        %v1723 = vmul.f32 %v1623, 0.5
        %v1724 = vmul.f32 %v1624, 0.5
        %v1725 = vmul.f32 %v1625, 0.5
        %v1726 = vmul.f32 %v1626, 0.5
        %v1727 = vmul.f32 %v1627, 0.5
        %v1728 = vmul.f32 %v1628, 0.5
        %v1729 = vmul.f32 %v1629, 0.5
        %v1730 = vmul.f32 %v1630, 0.5
        %v1731 = vmul.f32 %v1631, 0.5
        %v1732 = vmul.f32 %v1632, 0.5
        %v1733 = vmul.f32 %v1633, 0.5
        %v1734 = vmul.f32 %v1634, 0.5
        %v1735 = vmul.f32 %v1635, 0.5
        %v1736 = vmul.f32 %v1636, 0.5
        %v1737 = vmul.f32 %v1637, 0.5
        %v1738 = vmul.f32 %v1638, 0.5
        %v1739 = vmul.f32 %v1639, 0.5
        %v1740 = vmul.f32 %v1640, 0.5
        %v1741 = vmul.f32 %v1641, 0.5
        %v1742 = vmul.f32 %v1642, 0.5
        %v1743 = vmul.f32 %v1643, 0.5
        %v1744 = vmul.f32 %v1644, 0.5
        %v1745 = vmul.f32 %v1645, 0.5
        %v1746 = vmul.f32 %v1646, 0.5
        %v1747 = vmul.f32 %v1647, 0.5
        %v1748 = vmul.f32 %v1648, 0.5
        %v1749 = vmul.f32 %v1649, 0.5
        %v1750 = vmul.f32 %v1650, 0.5
        %v1751 = vmul.f32 %v1651, 0.5
        %v1752 = vmul.f32 %v1652, 0.5
        %v1753 = vmul.f32 %v1653, 0.5
        %v1754 = vmul.f32 %v1654, 0.5
        %v1755 = vmul.f32 %v1655, 0.5
        %v1756 = vmul.f32 %v1656, 0.5
        %v1757 = vmul.f32 %v1657, 0.5
        %v1758 = vmul.f32 %v1658, 0.5
        %v1759 = vmul.f32 %v1659, 0.5
        %v1760 = vmul.f32 %v1660, 0.5
        %v1761 = vmul.f32 %v1661, 0.5
        %v1762 = vmul.f32 %v1662, 0.5
        %v1763 = vmul.f32 %v1663, 0.5
        %v1764 = vmul.f32 %v1664, 0.5
        %v1765 = vmul.f32 %v1665, 0.5
        %v1766 = vmul.f32 %v1666, 0.5
        %v1767 = vmul.f32 %v1667, 0.5
        %v1768 = vmul.f32 %v1668, 0.5
        %v1769 = vmul.f32 %v1669, 0.5
        %v1770 = vmul.f32 %v1670, 0.5
        %v1771 = vmul.f32 %v1671, 0.5
        %v1772 = vmul.f32 %v1672, 0.5
        %v1773 = vmul.f32 %v1673, 0.5
        %v1774 = vmul.f32 %v1674, 0.5
        %v1775 = vmul.f32 %v1675, 0.5
        %v1776 = vmul.f32 %v1676, 0.5
        %v1777 = vmul.f32 %v1677, 0.5
        %v1778 = vmul.f32 %v1678, 0.5
        %v1779 = vmul.f32 %v1679, 0.5
        %v1780 = vadd.f32 %v1680, 0.5
        %v1781 = vadd.f32 %v1681, 0.5
        %v1782 = vadd.f32 %v1682, 0.5
        %v1783 = vadd.f32 %v1683, 0.5
        %v1784 = vadd.f32 %v1684, 0.5
        %v1785 = vadd.f32 %v1685, 0.5
        %v1786 = vadd.f32 %v1686, 0.5
        %v1787 = vadd.f32 %v1687, 0.5
        %v1788 = vadd.f32 %v1688, 0.5
        %v1789 = vadd.f32 %v1689, 0.5
        %v1790 = vadd.f32 %v1690, 0.5
        %v1791 = vadd.f32 %v1691, 0.5
        %v1792 = vadd.f32 %v1692, 0.5
        %v1793 = vadd.f32 %v1693, 0.5
        %v1794 = vadd.f32 %v1694, 0.5
        %v1795 = vadd.f32 %v1695, 0.5
        %v1796 = vadd.f32 %v1696, 0.5
        %v1797 = vadd.f32 %v1697, 0.5
        %v1798 = vadd.f32 %v1698, 0.5
        %v1799 = vadd.f32 %v1699, 0.5
        %v1800 = vadd.f32 %v1700, 0.5
        %v1801 = vadd.f32 %v1701, 0.5
        %v1802 = vadd.f32 %v1702, 0.5
        %v1803 = vadd.f32 %v1703, 0.5
        %v1804 = vadd.f32 %v1704, 0.5
        %v1805 = vadd.f32 %v1705, 0.5
        %v1806 = vadd.f32 %v1706, 0.5
        %v1807 = vadd.f32 %v1707, 0.5
        %v1808 = vadd.f32 %v1708, 0.5
        %v1809 = vadd.f32 %v1709, 0.5
        %v1810 = vadd.f32 %v1710, 0.5
        %v1811 = vadd.f32 %v1711, 0.5
        %v1812 = vadd.f32 %v1712, 0.5
        %v1813 = vadd.f32 %v1713, 0.5
        %v1814 = vadd.f32 %v1714, 0.5
        %v1815 = vadd.f32 %v1715, 0.5
        %v1816 = vadd.f32 %v1716, 0.5
        %v1817 = vadd.f32 %v1717, 0.5
        %v1818 = vadd.f32 %v1718, 0.5
        %v1819 = vadd.f32 %v1719, 0.5
        %v1820 = vadd.f32 %v1720, 0.5
        %v1821 = vadd.f32 %v1721, 0.5
        %v1822 = vadd.f32 %v1722, 0.5
        %v1823 = vadd.f32 %v1723, 0.5
        %v1824 = vadd.f32 %v1724, 0.5
        %v1825 = vadd.f32 %v1725, 0.5
        %v1826 = vadd.f32 %v1726, 0.5
        %v1827 = vadd.f32 %v1727, 0.5
        %v1828 = vadd.f32 %v1728, 0.5
        %v1829 = vadd.f32 %v1729, 0.5
        %v1830 = vadd.f32 %v1730, 0.5
        %v1831 = vadd.f32 %v1731, 0.5
        %v1832 = vadd.f32 %v1732, 0.5
        %v1833 = vadd.f32 %v1733, 0.5
        %v1834 = vadd.f32 %v1734, 0.5
        %v1835 = vadd.f32 %v1735, 0.5
        %v1836 = vadd.f32 %v1736, 0.5
        %v1837 = vadd.f32 %v1737, 0.5
        %v1838 = vadd.f32 %v1738, 0.5
        %v1839 = vadd.f32 %v1739, 0.5
        %v1840 = vadd.f32 %v1740, 0.5
        %v1841 = vadd.f32 %v1741, 0.5
        %v1842 = vadd.f32 %v1742, 0.5
        %v1843 = vadd.f32 %v1743, 0.5
        %v1844 = vadd.f32 %v1744, 0.5
        %v1845 = vadd.f32 %v1745, 0.5
        %v1846 = vadd.f32 %v1746, 0.5
        %v1847 = vadd.f32 %v1747, 0.5
        %v1848 = vadd.f32 %v1748, 0.5
        %v1849 = vadd.f32 %v1749, 0.5
        %v1850 = vadd.f32 %v1750, 0.5
        %v1851 = vadd.f32 %v1751, 0.5
        %v1852 = vadd.f32 %v1752, 0.5
        %v1853 = vadd.f32 %v1753, 0.5
        %v1854 = vadd.f32 %v1754, 0.5
        %v1855 = vadd.f32 %v1755, 0.5
        %v1856 = vadd.f32 %v1756, 0.5
        %v1857 = vadd.f32 %v1757, 0.5
        %v1858 = vadd.f32 %v1758, 0.5
        %v1859 = vadd.f32 %v1759, 0.5
        %v1860 = vadd.f32 %v1760, 0.5
        %v1861 = vadd.f32 %v1761, 0.5
        %v1862 = vadd.f32 %v1762, 0.5
        %v1863 = vadd.f32 %v1763, 0.5
        %v1864 = vadd.f32 %v1764, 0.5
        %v1865 = vadd.f32 %v1765, 0.5
        %v1866 = vadd.f32 %v1766, 0.5
        %v1867 = vadd.f32 %v1767, 0.5
        %v1868 = vadd.f32 %v1768, 0.5
        %v1869 = vadd.f32 %v1769, 0.5
        %v1870 = vadd.f32 %v1770, 0.5
        %v1871 = vadd.f32 %v1771, 0.5
        %v1872 = vadd.f32 %v1772, 0.5
        %v1873 = vadd.f32 %v1773, 0.5
        %v1874 = vadd.f32 %v1774, 0.5
        %v1875 = vadd.f32 %v1775, 0.5
        %v1876 = vadd.f32 %v1776, 0.5
        %v1877 = vadd.f32 %v1777, 0.5
        %v1878 = vadd.f32 %v1778, 0.5
        %v1879 = vadd.f32 %v1779, 0.5
        %v1880 = vmul.f32 %v902, %v1780
        %v1881 = vmul.f32 %v904, %v1781
        %v1882 = vmul.f32 %v1332, %v1782
        %v1883 = vmul.f32 %v1334, %v1783
        %v1884 = vmul.f32 %v908, %v1784
        %v1885 = vmul.f32 %v910, %v1785
        %v1886 = vmul.f32 %v1338, %v1786
        %v1887 = vmul.f32 %v1340, %v1787
        %v1888 = vmul.f32 %v914, %v1788
        %v1889 = vmul.f32 %v916, %v1789
        %v1890 = vmul.f32 %v1344, %v1790
        %v1891 = vmul.f32 %v1346, %v1791
        %v1892 = vmul.f32 %v920, %v1792
        %v1893 = vmul.f32 %v922, %v1793
        %v1894 = vmul.f32 %v1350, %v1794
        %v1895 = vmul.f32 %v1352, %v1795
        %v1896 = vmul.f32 %v926, %v1796
        %v1897 = vmul.f32 %v928, %v1797
        %v1898 = vmul.f32 %v1356, %v1798
        %v1899 = vmul.f32 %v1358, %v1799
        %v1900 = vmul.f32 %v932, %v1800
        %v1901 = vmul.f32 %v934, %v1801
        %v1902 = vmul.f32 %v1362, %v1802
        %v1903 = vmul.f32 %v1364, %v1803
        %v1904 = vmul.f32 %v938, %v1804
        %v1905 = vmul.f32 %v940, %v1805
        %v1906 = vmul.f32 %v1368, %v1806
        %v1907 = vmul.f32 %v1370, %v1807
        %v1908 = vmul.f32 %v944, %v1808
        %v1909 = vmul.f32 %v946, %v1809
        %v1910 = vmul.f32 %v1374, %v1810
        %v1911 = vmul.f32 %v1376, %v1811
        %v1912 = vmul.f32 %v950, %v1812
        %v1913 = vmul.f32 %v952, %v1813
        %v1914 = vmul.f32 %v1380, %v1814
        %v1915 = vmul.f32 %v1382, %v1815
        %v1916 = vmul.f32 %v956, %v1816
        %v1917 = vmul.f32 %v958, %v1817
        %v1918 = vmul.f32 %v1386, %v1818
        %v1919 = vmul.f32 %v1388, %v1819
        %v1920 = vmul.f32 %v962, %v1820
        %v1921 = vmul.f32 %v964, %v1821
        %v1922 = vmul.f32 %v1392, %v1822
        %v1923 = vmul.f32 %v1394, %v1823
        %v1924 = vmul.f32 %v968, %v1824
        %v1925 = vmul.f32 %v970, %v1825
        %v1926 = vmul.f32 %v1398, %v1826
        %v1927 = vmul.f32 %v1400, %v1827
        %v1928 = vmul.f32 %v974, %v1828
        %v1929 = vmul.f32 %v976, %v1829
        %v1930 = vmul.f32 %v1404, %v1830
        %v1931 = vmul.f32 %v1406, %v1831
        %v1932 = vmul.f32 %v980, %v1832
        %v1933 = vmul.f32 %v982, %v1833
        %v1934 = vmul.f32 %v1410, %v1834
        %v1935 = vmul.f32 %v1412, %v1835
        %v1936 = vmul.f32 %v986, %v1836
        %v1937 = vmul.f32 %v988, %v1837
        %v1938 = vmul.f32 %v1416, %v1838
        %v1939 = vmul.f32 %v1418, %v1839
        %v1940 = vmul.f32 %v992, %v1840
        %v1941 = vmul.f32 %v994, %v1841
        %v1942 = vmul.f32 %v1422, %v1842
        %v1943 = vmul.f32 %v1424, %v1843
        %v1944 = vmul.f32 %v998, %v1844
        %v1945 = vmul.f32 %v1000, %v1845
        %v1946 = vmul.f32 %v1428, %v1846
        %v1947 = vmul.f32 %v1430, %v1847
        %v1948 = vmul.f32 %v1004, %v1848
        %v1949 = vmul.f32 %v1006, %v1849
        %v1950 = vmul.f32 %v1434, %v1850
        %v1951 = vmul.f32 %v1436, %v1851
        %v1952 = vmul.f32 %v1010, %v1852
        %v1953 = vmul.f32 %v1012, %v1853
        %v1954 = vmul.f32 %v1440, %v1854
        %v1955 = vmul.f32 %v1442, %v1855
        %v1956 = vmul.f32 %v1016, %v1856
        %v1957 = vmul.f32 %v1018, %v1857
        %v1958 = vmul.f32 %v1446, %v1858
        %v1959 = vmul.f32 %v1448, %v1859
        %v1960 = vmul.f32 %v1022, %v1860
        %v1961 = vmul.f32 %v1024, %v1861
        %v1962 = vmul.f32 %v1452, %v1862
        %v1963 = vmul.f32 %v1454, %v1863
        %v1964 = vmul.f32 %v1028, %v1864
        %v1965 = vmul.f32 %v1030, %v1865
        %v1966 = vmul.f32 %v1458, %v1866
        %v1967 = vmul.f32 %v1460, %v1867
        %v1968 = vmul.f32 %v1034, %v1868
        %v1969 = vmul.f32 %v1036, %v1869
        %v1970 = vmul.f32 %v1464, %v1870
        %v1971 = vmul.f32 %v1466, %v1871
        %v1972 = vmul.f32 %v1040, %v1872
        %v1973 = vmul.f32 %v1042, %v1873
        %v1974 = vmul.f32 %v1470, %v1874
        %v1975 = vmul.f32 %v1472, %v1875
        %v1976 = vmul.f32 %v1046, %v1876
        %v1977 = vmul.f32 %v1048, %v1877
        %v1978 = vmul.f32 %v1476, %v1878
        %v1979 = vmul.f32 %v1478, %v1879
        %1980 = vst [vmem:[%s238] sm:$0xff] %v1880
        %1981 = vst [vmem:[%s238 + $0x8] sm:$0xff] %v1881
        %1982 = vst [vmem:[%s238 + $0x10] sm:$0xff] %v1882
        %1983 = vst [vmem:[%s238 + $0x18] sm:$0xff] %v1883
        %1984 = vst [vmem:[%s238 + $0x20] sm:$0xff] %v1884
        %1985 = vst [vmem:[%s238 + $0x28] sm:$0xff] %v1885
        %1986 = vst [vmem:[%s238 + $0x30] sm:$0xff] %v1886
        %1987 = vst [vmem:[%s238 + $0x38] sm:$0xff] %v1887
        %1988 = vst [vmem:[%s238 + $0x40] sm:$0xff] %v1888
        %1989 = vst [vmem:[%s238 + $0x48] sm:$0xff] %v1889
        %1990 = vst [vmem:[%s238 + $0x50] sm:$0xff] %v1890
        %1991 = vst [vmem:[%s238 + $0x58] sm:$0xff] %v1891
        %1992 = vst [vmem:[%s238 + $0x60] sm:$0xff] %v1892
        %1993 = vst [vmem:[%s238 + $0x68] sm:$0xff] %v1893
        %1994 = vst [vmem:[%s238 + $0x70] sm:$0xff] %v1894
        %1995 = vst [vmem:[%s238 + $0x78] sm:$0xff] %v1895
        %1996 = vst [vmem:[%s238 + $0x80] sm:$0xff] %v1896
        %1997 = vst [vmem:[%s238 + $0x88] sm:$0xff] %v1897
        %1998 = vst [vmem:[%s238 + $0x90] sm:$0xff] %v1898
        %1999 = vst [vmem:[%s238 + $0x98] sm:$0xff] %v1899
        %2000 = vst [vmem:[%s238 + $0xa0] sm:$0xff] %v1900
        %2001 = vst [vmem:[%s238 + $0xa8] sm:$0xff] %v1901
        %2002 = vst [vmem:[%s238 + $0xb0] sm:$0xff] %v1902
        %2003 = vst [vmem:[%s238 + $0xb8] sm:$0xff] %v1903
        %2004 = vst [vmem:[%s238 + $0xc0] sm:$0xff] %v1904
        %2005 = vst [vmem:[%s238 + $0xc8] sm:$0xff] %v1905
        %2006 = vst [vmem:[%s238 + $0xd0] sm:$0xff] %v1906
        %2007 = vst [vmem:[%s238 + $0xd8] sm:$0xff] %v1907
        %2008 = vst [vmem:[%s238 + $0xe0] sm:$0xff] %v1908
        %2009 = vst [vmem:[%s238 + $0xe8] sm:$0xff] %v1909
        %2010 = vst [vmem:[%s238 + $0xf0] sm:$0xff] %v1910
        %2011 = vst [vmem:[%s238 + $0xf8] sm:$0xff] %v1911
        %2012 = vst [vmem:[%s238 + $0x100] sm:$0xff] %v1912
        %2013 = vst [vmem:[%s238 + $0x108] sm:$0xff] %v1913
        %2014 = vst [vmem:[%s238 + $0x110] sm:$0xff] %v1914
        %2015 = vst [vmem:[%s238 + $0x118] sm:$0xff] %v1915
        %2016 = vst [vmem:[%s238 + $0x120] sm:$0xff] %v1916
        %2017 = vst [vmem:[%s238 + $0x128] sm:$0xff] %v1917
        %2018 = vst [vmem:[%s238 + $0x130] sm:$0xff] %v1918
        %2019 = vst [vmem:[%s238 + $0x138] sm:$0xff] %v1919
        %2020 = vst [vmem:[%s238 + $0x140] sm:$0xff] %v1920
        %2021 = vst [vmem:[%s238 + $0x148] sm:$0xff] %v1921
        %2022 = vst [vmem:[%s238 + $0x150] sm:$0xff] %v1922
        %2023 = vst [vmem:[%s238 + $0x158] sm:$0xff] %v1923
        %2024 = vst [vmem:[%s238 + $0x160] sm:$0xff] %v1924
        %2025 = vst [vmem:[%s238 + $0x168] sm:$0xff] %v1925
        %2026 = vst [vmem:[%s238 + $0x170] sm:$0xff] %v1926
        %2027 = vst [vmem:[%s238 + $0x178] sm:$0xff] %v1927
        %2028 = vst [vmem:[%s238 + $0x180] sm:$0xff] %v1928
        %2029 = vst [vmem:[%s238 + $0x188] sm:$0xff] %v1929
        %2030 = vst [vmem:[%s238 + $0x190] sm:$0xff] %v1930
        %2031 = vst [vmem:[%s238 + $0x198] sm:$0xff] %v1931
        %2032 = vst [vmem:[%s238 + $0x1a0] sm:$0xff] %v1932
        %2033 = vst [vmem:[%s238 + $0x1a8] sm:$0xff] %v1933
        %2034 = vst [vmem:[%s238 + $0x1b0] sm:$0xff] %v1934
        %2035 = vst [vmem:[%s238 + $0x1b8] sm:$0xff] %v1935
        %2036 = vst [vmem:[%s238 + $0x1c0] sm:$0xff] %v1936
        %2037 = vst [vmem:[%s238 + $0x1c8] sm:$0xff] %v1937
        %2038 = vst [vmem:[%s238 + $0x1d0] sm:$0xff] %v1938
        %2039 = vst [vmem:[%s238 + $0x1d8] sm:$0xff] %v1939
        %2040 = vst [vmem:[%s238 + $0x1e0] sm:$0xff] %v1940
        %2041 = vst [vmem:[%s238 + $0x1e8] sm:$0xff] %v1941
        %2042 = vst [vmem:[%s238 + $0x1f0] sm:$0xff] %v1942
        %2043 = vst [vmem:[%s238 + $0x1f8] sm:$0xff] %v1943
        %2044 = vst [vmem:[%s238 + $0x200] sm:$0xff] %v1944
        %2045 = vst [vmem:[%s238 + $0x208] sm:$0xff] %v1945
        %2046 = vst [vmem:[%s238 + $0x210] sm:$0xff] %v1946
        %2047 = vst [vmem:[%s238 + $0x218] sm:$0xff] %v1947
        %2048 = vst [vmem:[%s238 + $0x220] sm:$0xff] %v1948
        %2049 = vst [vmem:[%s238 + $0x228] sm:$0xff] %v1949
        %2050 = vst [vmem:[%s238 + $0x230] sm:$0xff] %v1950
        %2051 = vst [vmem:[%s238 + $0x238] sm:$0xff] %v1951
        %2052 = vst [vmem:[%s238 + $0x240] sm:$0xff] %v1952
        %2053 = vst [vmem:[%s238 + $0x248] sm:$0xff] %v1953
        %2054 = vst [vmem:[%s238 + $0x250] sm:$0xff] %v1954
        %2055 = vst [vmem:[%s238 + $0x258] sm:$0xff] %v1955
        %2056 = vst [vmem:[%s238 + $0x260] sm:$0xff] %v1956
        %2057 = vst [vmem:[%s238 + $0x268] sm:$0xff] %v1957
        %2058 = vst [vmem:[%s238 + $0x270] sm:$0xff] %v1958
        %2059 = vst [vmem:[%s238 + $0x278] sm:$0xff] %v1959
        %2060 = vst [vmem:[%s238 + $0x280] sm:$0xff] %v1960
        %2061 = vst [vmem:[%s238 + $0x288] sm:$0xff] %v1961
        %2062 = vst [vmem:[%s238 + $0x290] sm:$0xff] %v1962
        %2063 = vst [vmem:[%s238 + $0x298] sm:$0xff] %v1963
        %2064 = vst [vmem:[%s238 + $0x2a0] sm:$0xff] %v1964
        %2065 = vst [vmem:[%s238 + $0x2a8] sm:$0xff] %v1965
        %2066 = vst [vmem:[%s238 + $0x2b0] sm:$0xff] %v1966
        %2067 = vst [vmem:[%s238 + $0x2b8] sm:$0xff] %v1967
        %2068 = vst [vmem:[%s238 + $0x2c0] sm:$0xff] %v1968
        %2069 = vst [vmem:[%s238 + $0x2c8] sm:$0xff] %v1969
        %2070 = vst [vmem:[%s238 + $0x2d0] sm:$0xff] %v1970
        %2071 = vst [vmem:[%s238 + $0x2d8] sm:$0xff] %v1971
        %2072 = vst [vmem:[%s238 + $0x2e0] sm:$0xff] %v1972
        %2073 = vst [vmem:[%s238 + $0x2e8] sm:$0xff] %v1973
        %2074 = vst [vmem:[%s238 + $0x2f0] sm:$0xff] %v1974
        %2075 = vst [vmem:[%s238 + $0x2f8] sm:$0xff] %v1975
        %2076 = vst [vmem:[%s238 + $0x300] sm:$0xf] %v1976
        %2077 = vst [vmem:[%s238 + $0x308] sm:$0xf] %v1977
        %2078 = vst [vmem:[%s238 + $0x310] sm:$0xf] %v1978
        %2079 = vst [vmem:[%s238 + $0x318] sm:$0xf] %v1979
        %s2080 = sand.u32 %s102, 1
        %s2081 = scalar_lea.sflag [#allocation4], %s2080
        %s2082 = sand.u32 %s102, 1
        %s2083 = smul.addr %s2082, 800
        %s2084 = scalar_lea.vmem [#allocation8], %s2083
        // Predicated region
        $region45: #{tpu_custom_call.1} parent=31 // pred_check
          %p2085 = pneg %p112
        $region46: #{tpu_custom_call.1} parent=31 // pred_check_branch
          %2087 = sbr.rel (%p2085) target = $region48
        $region47: #{tpu_custom_call.1} parent=31 // pred_region
          %s2088 = smul.u32 4, %s21
          %s2090 = ssub.s32 12800, 12800
          %2091 = vsyncadd %s2081, %s2090
          %s2092 = smul.addr %s2088, 128
          %s2093 = scalar_lea.hbm %s3, %s2092
          %s2094 = sshll.u32 %s2084, 4
          %s2095 = int_to_ptr.vmem [resolvable:$true] %s2094
          %2100 = dma.vmem_to_hbm [thread:$0]  %s2095, 12800, %s2093, %s2081, 512, 2048, 32
        $region48: #{tpu_custom_call.1} parent=31 // pred_fallthru
          _
      $region32: #{tpu_custom_call.1} parent=5 // pred_fallthru
        _
      %p2101 = scmp.le.s32.totalorder 2, %s16
      // Predicated region
      $region49: #{tpu_custom_call.1} parent=5 // pred_check
        %p2102 = pneg %p2101
      $region50: #{tpu_custom_call.1} parent=5 // pred_check_branch
        %2104 = sbr.rel (%p2102) target = $region52
      $region51: #{tpu_custom_call.1} parent=5 // pred_region
        %s2105 = ssub.s32 %s16, 2
        // Predicated region
        $region53: #{tpu_custom_call.1} parent=51 // pred_check
          %p2106 = pneg %p118
        $region54: #{tpu_custom_call.1} parent=51 // pred_check_branch
          %2108 = sbr.rel (%p2106) target = $region56
        $region55: #{tpu_custom_call.1} parent=51 // pred_region
          %s2109 = sand.u32 %s103, 1
          %s2110 = scalar_lea.sflag [#allocation4], %s2109
          %s2111 = sand.u32 %s103, 1
          %s2112 = smul.addr %s2111, 800
          %s2113 = scalar_lea.vmem [#allocation8], %s2112
          %2114 = dma.done %s2110, 12800
        $region56: #{tpu_custom_call.1} parent=51 // pred_fallthru
          _
      $region52: #{tpu_custom_call.1} parent=5 // pred_fallthru
        _
    $region6: #{tpu_custom_call.1} parent=1 // loop_footer
      %s20 = sadd.s32 1, %s16
    $region7: #{tpu_custom_call.1} parent=1 // loop_footer_branch
      %15 = sbr.rel target = $region3
    $region8: #{tpu_custom_call.1} parent=1 // loop_exit
      _
    %2115 = vsyncpa [#allocation3], 1
    %s2116 = scalar_lea.sflag [#allocation3], 1
    %2117 = vsyncpa %s2116, 1
    %2118 = vsyncpa [#allocation6], 1
    %s2119 = scalar_lea.sflag [#allocation6], 1
    %2120 = vsyncpa %s2119, 1
    %2121 = vsyncpa [#allocation4], 1
    %s2122 = scalar_lea.sflag [#allocation4], 1
    %2123 = vsyncpa %s2122, 1

</llo_original>
